<compile_context>
chip_gen: v7x
topology: tpu7x:2x2x1
jax: 0.10.0
libtpu: 0.0.40
codegen_flags: <defaults>
</compile_context>

<pallas_src>
import numpy as np
import jax
import jax.numpy as jnp
from jax import lax
from jax.experimental import pallas as pl
from jax.experimental.pallas import tpu as pltpu

EPS = 1e-6        # LayerNorm2d (NAFNet) eps
COS_EPS = 1e-12   # clamp on ||v||^2 in the cosine attention

# Column layout of the packed per-channel parameter array `vecs` (2c, NUM_VEC_COLS).
# c-long vectors occupy rows [0, c); 2c-long vectors use all rows; padding is 0.
(V_LN1W, V_LN1B, V_B1, V_B2, V_BSCA, V_B3, V_LN2W, V_LN2B,
 V_B4, V_B5, V_BETA, V_GAMMA, V_FTN, V_DW0) = range(14)
NUM_VEC_COLS = V_DW0 + 9          # + the 9 depthwise-conv taps of conv2


def make_pablock_kernel(c, H, W, nb):
    HW = H * W
    dw = 2 * c

    def kernel(inp_ref, w1_ref, w4_ref, w3_ref, w5_ref, wsca_ref,
               vecs_ref, masks_ref, out_ref):
        # ---- grid-invariant parameters (loaded once per grid step) ----------
        vv = vecs_ref[...]                                  # (2c, 22) f32

        def vcol(i, rows=c):
            return vv[0:rows, i:i + 1]                      # (rows, 1) static slice

        ln1w, ln1b = vcol(V_LN1W), vcol(V_LN1B)
        b1, b2 = vcol(V_B1, dw), vcol(V_B2, dw)
        bsca, b3 = vcol(V_BSCA), vcol(V_B3)
        ln2w, ln2b = vcol(V_LN2W), vcol(V_LN2B)
        b4, b5 = vcol(V_B4, dw), vcol(V_B5)
        beta, gamma, ftn = vcol(V_BETA), vcol(V_GAMMA), vcol(V_FTN)
        w2_taps = [vcol(V_DW0 + k, dw) for k in range(9)]       # 9 x (2c, 1)
        mask_rows = [masks_ref[k:k + 1, :] for k in range(9)]    # (1, HW) each

        w1, w4 = w1_ref[...], w4_ref[...]                   # (2c, c) bf16
        w3, w5, wsca = w3_ref[...], w5_ref[...], wsca_ref[...]  # (c, c) bf16

        def layernorm(v, w, b):
            # NAFNet LayerNorm2d: per-pixel stats over channels (sublanes), f32.
            mu = jnp.mean(v, axis=0, keepdims=True)
            var = jnp.mean((v - mu) ** 2, axis=0, keepdims=True)
            return (v - mu) * lax.rsqrt(var + EPS) * w + b

        def mm(wmat_bf16, a):
            # 1x1 conv on the MXU: bf16 operands, f32 accumulation.
            return jnp.dot(wmat_bf16, a.astype(jnp.bfloat16),
                           preferred_element_type=jnp.float32)

        def dwconv3x3(t):
            # Depthwise 3x3, padding=1, fused over all 2c channels.
            # Each tap = static lane rotation of the flattened HW axis (XLU)
            # + precomputed border mask (VPU multiply, grid invariant).
            acc = jnp.zeros_like(t)
            for ky in range(3):
                for kx in range(3):
                    k = ky * 3 + kx
                    off = (ky - 1) * W + (kx - 1)
                    tap = t if off == 0 else pltpu.roll(t, shift=(-off) % HW, axis=1)
                    if k != 4:
                        tap = tap * mask_rows[k]
                    acc = acc + tap * w2_taps[k]
            return acc + b2

        # (HW,1) ones column so the global average pool runs on the MXU
        # instead of the XLU (which the dwconv rolls already use).
        pool_ones = jnp.full((HW, 1), 1.0 / HW, dtype=jnp.float32)

        # Several images per grid step to amortize per-step pipeline overhead.
        for b_img in range(nb):
            x2d = inp_ref[b_img]                            # (c, HW) f32

            # ---- branch 1: norm1 -> conv1 (2c) -> dw conv2 -> SG -> SCA -> conv3
            xn = layernorm(x2d, ln1w, ln1b)
            u = dwconv3x3(mm(w1, xn) + b1)                  # (2c, HW)
            g = u[:c] * u[c:]                               # SimpleGate
            pooled = jnp.dot(g, pool_ones,
                             preferred_element_type=jnp.float32)        # (c, 1)
            sca = jnp.dot(wsca, pooled.astype(jnp.bfloat16),
                          preferred_element_type=jnp.float32) + bsca
            y = x2d + (mm(w3, g * sca) + b3) * beta

            # ---- branch 2: norm2 -> conv4 (2c) -> SG -> cosine attn -> conv5
            yn = layernorm(y, ln2w, ln2b)
            vfull = mm(w4, yn) + b4
            v = vfull[:c] * vfull[c:]
            # cosine similarity against the pre-normalized, grid-invariant ftn:
            # sum_c(v*ftn) * rsqrt(sum_c(v*v)); clamp guards zero-norm pixels.
            attn = (jnp.sum(v * ftn, axis=0, keepdims=True)
                    * lax.rsqrt(jnp.maximum(
                        jnp.sum(v * v, axis=0, keepdims=True), COS_EPS)))
            out_ref[b_img] = y + (mm(w5, v * attn) + b5) * gamma

    return kernel


def _border_masks(H, W):
    """(9, H*W) f32 masks, one per 3x3 tap (row 4 = center, unused)."""
    HW = H * W
    hh, ww = np.divmod(np.arange(HW), W)
    m = np.zeros((9, HW), np.float32)
    for ky in range(3):
        for kx in range(3):
            dy, dx = ky - 1, kx - 1
            ok = np.ones(HW, bool)
            if dy == -1:
                ok &= hh >= 1
            if dy == 1:
                ok &= hh <= H - 2
            if dx == -1:
                ok &= ww >= 1
            if dx == 1:
                ok &= ww <= W - 2
            m[ky * 3 + kx] = ok
    return m


def _const_spec(shape):
    nd = len(shape)
    return pl.BlockSpec(shape, lambda n, _nd=nd: (0,) * _nd)


def pablock_forward(inp_nchw, ft, P):
    """inp_nchw: (N, C, H, W) float32; ft: (1, 512) float32."""
    N, C, H, W = inp_nchw.shape
    c, dw, HW = C, 2 * C, H * W
    # NCHW -> (N, C, H*W): contiguous reshape only; HW lands on the lane axis.
    x = inp_nchw.reshape(N, C, HW).astype(jnp.float32)

    # Grid-invariant feature affine + L2 normalization hoisted out of the kernel.
    ftc = ft.astype(jnp.float32) @ P["waff"].T + P["baff"]           # (1, c)
    ftn = (ftc / jnp.linalg.norm(ftc, axis=-1, keepdims=True)).reshape(c)

    # Pack all tiny per-channel parameters into a single (2c, 22) array.
    def pad2c(v):
        v = jnp.asarray(v, jnp.float32).reshape(-1)
        if v.shape[0] == dw:
            return v
        return jnp.concatenate([v, jnp.zeros((dw - v.shape[0],), jnp.float32)])

    cols = [P["ln1_w"], P["ln1_b"], P["b1"], P["b2"], P["bsca"], P["b3"],
            P["ln2_w"], P["ln2_b"], P["b4"], P["b5"], P["beta"], P["gamma"], ftn]
    cols += [P["w2"].reshape(dw, 9)[:, k] for k in range(9)]
    assert len(cols) == NUM_VEC_COLS
    vecs = jnp.stack([pad2c(v) for v in cols], axis=1)               # (2c, 22)
    masks = jnp.asarray(_border_masks(H, W))                         # (9, HW)

    # MXU weights in bf16 (f32 accumulation happens inside the kernel).
    w_bf16 = [jnp.asarray(P[k], jnp.float32).astype(jnp.bfloat16)
              for k in ("w1", "w4", "w3", "w5", "wsca")]

    # More work per grid step: fold the batch into one block when small enough.
    nb = N if N * C * HW * 4 * 4 <= (8 << 20) else 1
    grid = (N // nb,)

    in_specs = [pl.BlockSpec((nb, C, HW), lambda n: (n, 0, 0))]
    in_specs += [_const_spec(w.shape) for w in w_bf16]
    in_specs += [_const_spec(vecs.shape), _const_spec(masks.shape)]

    out = pl.pallas_call(
        make_pablock_kernel(c, H, W, nb),
        out_shape=jax.ShapeDtypeStruct((N, C, HW), jnp.float32),
        grid=grid,
        in_specs=in_specs,
        out_specs=pl.BlockSpec((nb, C, HW), lambda n: (n, 0, 0)),
        compiler_params=pltpu.CompilerParams(dimension_semantics=("parallel",)),
    )(x, *w_bf16, vecs, masks)
    return out.reshape(N, C, H, W)


# -------------------- plain-JAX reference (mirrors the PyTorch code) ------------
def pablock_reference(inp, ft, P):
    def ln2d(x, w, b):
        mu = x.mean(axis=1, keepdims=True)
        var = ((x - mu) ** 2).mean(axis=1, keepdims=True)
        y = (x - mu) / jnp.sqrt(var + EPS)
        return w.reshape(1, -1, 1, 1) * y + b.reshape(1, -1, 1, 1)

    def conv1x1(x, w, b):
        return jnp.einsum("nchw,oc->nohw", x, w) + b.reshape(1, -1, 1, 1)

    def dwconv(x, w, b):
        out = lax.conv_general_dilated(
            x, w[:, None, :, :], window_strides=(1, 1), padding=((1, 1), (1, 1)),
            dimension_numbers=("NCHW", "OIHW", "NCHW"),
            feature_group_count=x.shape[1])
        return out + b.reshape(1, -1, 1, 1)

    x = ln2d(inp, P["ln1_w"], P["ln1_b"])
    x = conv1x1(x, P["w1"], P["b1"])
    x = dwconv(x, P["w2"], P["b2"])
    x1, x2 = jnp.split(x, 2, axis=1)
    x = x1 * x2
    pooled = x.mean(axis=(2, 3), keepdims=True)
    sca = jnp.einsum("ncij,oc->noij", pooled, P["wsca"]) + P["bsca"].reshape(1, -1, 1, 1)
    x = x * sca
    x = conv1x1(x, P["w3"], P["b3"])
    y = inp + x * P["beta"].reshape(1, -1, 1, 1)

    x = conv1x1(ln2d(y, P["ln2_w"], P["ln2_b"]), P["w4"], P["b4"])
    x1, x2 = jnp.split(x, 2, axis=1)
    x = x1 * x2
    ftc = (ft @ P["waff"].T + P["baff"]).reshape(1, -1, 1, 1)
    attn = ((x / jnp.linalg.norm(x, axis=1, keepdims=True))
            * (ftc / jnp.linalg.norm(ftc, axis=1, keepdims=True))).sum(axis=1, keepdims=True)
    x = x * attn
    x = conv1x1(x, P["w5"], P["b5"])
    return y + x * P["gamma"].reshape(1, -1, 1, 1)


def make_params(key, c):
    dw = 2 * c      # DW_Expand = 2
    ffn = 2 * c     # FFN_Expand = 2
    ks = jax.random.split(key, 24)

    def rnd(k, shape, scale=0.3):
        return scale * jax.random.normal(k, shape, dtype=jnp.float32)

    return {
        "ln1_w": 1.0 + rnd(ks[0], (c,), 0.1), "ln1_b": rnd(ks[1], (c,), 0.1),
        "w1": rnd(ks[2], (dw, c)), "b1": rnd(ks[3], (dw,), 0.1),
        "w2": rnd(ks[4], (dw, 3, 3)), "b2": rnd(ks[5], (dw,), 0.1),
        "wsca": rnd(ks[6], (c, c)), "bsca": rnd(ks[7], (c,), 0.1),
        "w3": rnd(ks[8], (c, c)), "b3": rnd(ks[9], (c,), 0.1),
        "ln2_w": 1.0 + rnd(ks[10], (c,), 0.1), "ln2_b": rnd(ks[11], (c,), 0.1),
        "w4": rnd(ks[12], (ffn, c)), "b4": rnd(ks[13], (ffn,), 0.1),
        "w5": rnd(ks[14], (c, c)), "b5": rnd(ks[15], (c,), 0.1),
        "waff": rnd(ks[16], (c, 512), 0.05), "baff": rnd(ks[17], (c,), 0.1),
        # PyTorch __init__ zero-inits beta/gamma; nonzero here so both residual
        # branches are exercised by the test.
        "beta": rnd(ks[18], (c,), 0.5),
        "gamma": rnd(ks[19], (c,), 0.5),
    }


if __name__ == "__main__":
    key = jax.random.PRNGKey(0)
    k_inp, k_ft, k_par = jax.random.split(key, 3)
    N, C, H, W = 2, 4, 16, 16
    inp = jax.random.normal(k_inp, (N, C, H, W), dtype=jnp.float32)
    ft = jax.random.normal(k_ft, (1, 512), dtype=jnp.float32)
    P = make_params(k_par, C)

    out = pablock_forward(inp, ft, P)
    out = jax.block_until_ready(out)

    ref = pablock_reference(inp, ft, P)
    # Tolerance covers the bf16 MXU operands (f32 accumulation) in the kernel.
    np.testing.assert_allclose(np.asarray(out), np.asarray(ref), rtol=2e-2, atol=2e-2)
    print("KERNEL_OK")
</pallas_src>

<mosaic_0001>
module attributes {stable_mosaic.version = 11 : i64} {
  func.func @kernel(%arg0: i32, %arg1: memref<2x4x256xf32, #tpu.memory_space<vmem>>, %arg2: memref<8x4xbf16, #tpu.memory_space<vmem>>, %arg3: memref<8x4xbf16, #tpu.memory_space<vmem>>, %arg4: memref<4x4xbf16, #tpu.memory_space<vmem>>, %arg5: memref<4x4xbf16, #tpu.memory_space<vmem>>, %arg6: memref<4x4xbf16, #tpu.memory_space<vmem>>, %arg7: memref<8x22xf32, #tpu.memory_space<vmem>>, %arg8: memref<9x256xf32, #tpu.memory_space<vmem>>, %arg9: memref<2x4x256xf32, #tpu.memory_space<vmem>>) attributes {dimension_semantics = [#tpu.dimension_semantics<parallel>], iteration_bounds = array<i64: 1>, scalar_prefetch = 0 : i64, scratch_operands = 0 : i64, tpu.core_type = #tpu.core_type<tc>, window_params = [{transform_indices = @transform_0, window_bounds = array<i64: 2, 4, 256>}, {pipeline_mode = #tpu.pipeline_mode<synchronous>, transform_indices = @transform_1, window_bounds = array<i64: 8, 4>}, {pipeline_mode = #tpu.pipeline_mode<synchronous>, transform_indices = @transform_2, window_bounds = array<i64: 8, 4>}, {pipeline_mode = #tpu.pipeline_mode<synchronous>, transform_indices = @transform_3, window_bounds = array<i64: 4, 4>}, {pipeline_mode = #tpu.pipeline_mode<synchronous>, transform_indices = @transform_4, window_bounds = array<i64: 4, 4>}, {pipeline_mode = #tpu.pipeline_mode<synchronous>, transform_indices = @transform_5, window_bounds = array<i64: 4, 4>}, {pipeline_mode = #tpu.pipeline_mode<synchronous>, transform_indices = @transform_6, window_bounds = array<i64: 8, 22>}, {pipeline_mode = #tpu.pipeline_mode<synchronous>, transform_indices = @transform_7, window_bounds = array<i64: 9, 256>}, {transform_indices = @transform_8, window_bounds = array<i64: 2, 4, 256>}]} {
    %c0 = arith.constant 0 : index
    %c0_0 = arith.constant 0 : index
    %0 = vector.load %arg7[%c0, %c0_0] : memref<8x22xf32, #tpu.memory_space<vmem>>, vector<8x22xf32>
    %1 = vector.extract_strided_slice %0 {offsets = [0, 0], sizes = [4, 1], strides = [1, 1]} : vector<8x22xf32> to vector<4x1xf32>
    %2 = vector.extract_strided_slice %0 {offsets = [0, 1], sizes = [4, 1], strides = [1, 1]} : vector<8x22xf32> to vector<4x1xf32>
    %3 = vector.extract_strided_slice %0 {offsets = [0, 2], sizes = [8, 1], strides = [1, 1]} : vector<8x22xf32> to vector<8x1xf32>
    %4 = vector.extract_strided_slice %0 {offsets = [0, 3], sizes = [8, 1], strides = [1, 1]} : vector<8x22xf32> to vector<8x1xf32>
    %5 = vector.extract_strided_slice %0 {offsets = [0, 4], sizes = [4, 1], strides = [1, 1]} : vector<8x22xf32> to vector<4x1xf32>
    %6 = vector.extract_strided_slice %0 {offsets = [0, 5], sizes = [4, 1], strides = [1, 1]} : vector<8x22xf32> to vector<4x1xf32>
    %7 = vector.extract_strided_slice %0 {offsets = [0, 6], sizes = [4, 1], strides = [1, 1]} : vector<8x22xf32> to vector<4x1xf32>
    %8 = vector.extract_strided_slice %0 {offsets = [0, 7], sizes = [4, 1], strides = [1, 1]} : vector<8x22xf32> to vector<4x1xf32>
    %9 = vector.extract_strided_slice %0 {offsets = [0, 8], sizes = [8, 1], strides = [1, 1]} : vector<8x22xf32> to vector<8x1xf32>
    %10 = vector.extract_strided_slice %0 {offsets = [0, 9], sizes = [4, 1], strides = [1, 1]} : vector<8x22xf32> to vector<4x1xf32>
    %11 = vector.extract_strided_slice %0 {offsets = [0, 10], sizes = [4, 1], strides = [1, 1]} : vector<8x22xf32> to vector<4x1xf32>
    %12 = vector.extract_strided_slice %0 {offsets = [0, 11], sizes = [4, 1], strides = [1, 1]} : vector<8x22xf32> to vector<4x1xf32>
    %13 = vector.extract_strided_slice %0 {offsets = [0, 12], sizes = [4, 1], strides = [1, 1]} : vector<8x22xf32> to vector<4x1xf32>
    %14 = vector.extract_strided_slice %0 {offsets = [0, 13], sizes = [8, 1], strides = [1, 1]} : vector<8x22xf32> to vector<8x1xf32>
    %15 = vector.extract_strided_slice %0 {offsets = [0, 14], sizes = [8, 1], strides = [1, 1]} : vector<8x22xf32> to vector<8x1xf32>
    %16 = vector.extract_strided_slice %0 {offsets = [0, 15], sizes = [8, 1], strides = [1, 1]} : vector<8x22xf32> to vector<8x1xf32>
    %17 = vector.extract_strided_slice %0 {offsets = [0, 16], sizes = [8, 1], strides = [1, 1]} : vector<8x22xf32> to vector<8x1xf32>
    %18 = vector.extract_strided_slice %0 {offsets = [0, 17], sizes = [8, 1], strides = [1, 1]} : vector<8x22xf32> to vector<8x1xf32>
    %19 = vector.extract_strided_slice %0 {offsets = [0, 18], sizes = [8, 1], strides = [1, 1]} : vector<8x22xf32> to vector<8x1xf32>
    %20 = vector.extract_strided_slice %0 {offsets = [0, 19], sizes = [8, 1], strides = [1, 1]} : vector<8x22xf32> to vector<8x1xf32>
    %21 = vector.extract_strided_slice %0 {offsets = [0, 20], sizes = [8, 1], strides = [1, 1]} : vector<8x22xf32> to vector<8x1xf32>
    %22 = vector.extract_strided_slice %0 {offsets = [0, 21], sizes = [8, 1], strides = [1, 1]} : vector<8x22xf32> to vector<8x1xf32>
    %c0_1 = arith.constant 0 : index
    %c0_2 = arith.constant 0 : index
    %23 = vector.load %arg8[%c0_1, %c0_2] : memref<9x256xf32, #tpu.memory_space<vmem>>, vector<1x256xf32>
    %c1 = arith.constant 1 : index
    %c0_3 = arith.constant 0 : index
    %24 = vector.load %arg8[%c1, %c0_3] : memref<9x256xf32, #tpu.memory_space<vmem>>, vector<1x256xf32>
    %c2 = arith.constant 2 : index
    %c0_4 = arith.constant 0 : index
    %25 = vector.load %arg8[%c2, %c0_4] : memref<9x256xf32, #tpu.memory_space<vmem>>, vector<1x256xf32>
    %c3 = arith.constant 3 : index
    %c0_5 = arith.constant 0 : index
    %26 = vector.load %arg8[%c3, %c0_5] : memref<9x256xf32, #tpu.memory_space<vmem>>, vector<1x256xf32>
    %c5 = arith.constant 5 : index
    %c0_6 = arith.constant 0 : index
    %27 = vector.load %arg8[%c5, %c0_6] : memref<9x256xf32, #tpu.memory_space<vmem>>, vector<1x256xf32>
    %c6 = arith.constant 6 : index
    %c0_7 = arith.constant 0 : index
    %28 = vector.load %arg8[%c6, %c0_7] : memref<9x256xf32, #tpu.memory_space<vmem>>, vector<1x256xf32>
    %c7 = arith.constant 7 : index
    %c0_8 = arith.constant 0 : index
    %29 = vector.load %arg8[%c7, %c0_8] : memref<9x256xf32, #tpu.memory_space<vmem>>, vector<1x256xf32>
    %c8 = arith.constant 8 : index
    %c0_9 = arith.constant 0 : index
    %30 = vector.load %arg8[%c8, %c0_9] : memref<9x256xf32, #tpu.memory_space<vmem>>, vector<1x256xf32>
    %c0_10 = arith.constant 0 : index
    %c0_11 = arith.constant 0 : index
    %31 = vector.load %arg2[%c0_10, %c0_11] : memref<8x4xbf16, #tpu.memory_space<vmem>>, vector<8x4xbf16>
    %c0_12 = arith.constant 0 : index
    %c0_13 = arith.constant 0 : index
    %32 = vector.load %arg3[%c0_12, %c0_13] : memref<8x4xbf16, #tpu.memory_space<vmem>>, vector<8x4xbf16>
    %c0_14 = arith.constant 0 : index
    %c0_15 = arith.constant 0 : index
    %33 = vector.load %arg4[%c0_14, %c0_15] : memref<4x4xbf16, #tpu.memory_space<vmem>>, vector<4x4xbf16>
    %c0_16 = arith.constant 0 : index
    %c0_17 = arith.constant 0 : index
    %34 = vector.load %arg5[%c0_16, %c0_17] : memref<4x4xbf16, #tpu.memory_space<vmem>>, vector<4x4xbf16>
    %c0_18 = arith.constant 0 : index
    %c0_19 = arith.constant 0 : index
    %35 = vector.load %arg6[%c0_18, %c0_19] : memref<4x4xbf16, #tpu.memory_space<vmem>>, vector<4x4xbf16>
    %cst = arith.constant 3.906250e-03 : f32
    %36 = vector.broadcast %cst : f32 to vector<256x1xf32>
    %c0_20 = arith.constant 0 : index
    %c0_21 = arith.constant 0 : index
    %c0_22 = arith.constant 0 : index
    %37 = vector.load %arg1[%c0_20, %c0_21, %c0_22] : memref<2x4x256xf32, #tpu.memory_space<vmem>>, vector<1x4x256xf32>
    %38 = vector.shape_cast %37 : vector<1x4x256xf32> to vector<4x256xf32>
    %cst_23 = arith.constant dense<0.000000e+00> : vector<256xf32>
    %39 = vector.multi_reduction <add>, %38, %cst_23 [0] : vector<4x256xf32> to vector<256xf32>
    %40 = vector.shape_cast %39 : vector<256xf32> to vector<1x256xf32>
    %cst_24 = arith.constant 4.000000e+00 : f32
    %41 = vector.broadcast %cst_24 : f32 to vector<1x256xf32>
    %42 = arith.divf %40, %41 : vector<1x256xf32>
    %43 = vector.broadcast %42 : vector<1x256xf32> to vector<4x256xf32>
    %44 = arith.subf %38, %43 : vector<4x256xf32>
    %45 = arith.mulf %44, %44 : vector<4x256xf32>
    %cst_25 = arith.constant dense<0.000000e+00> : vector<256xf32>
    %46 = vector.multi_reduction <add>, %45, %cst_25 [0] : vector<4x256xf32> to vector<256xf32>
    %47 = vector.shape_cast %46 : vector<256xf32> to vector<1x256xf32>
    %cst_26 = arith.constant 4.000000e+00 : f32
    %48 = vector.broadcast %cst_26 : f32 to vector<1x256xf32>
    %49 = arith.divf %47, %48 : vector<1x256xf32>
    %50 = vector.broadcast %42 : vector<1x256xf32> to vector<4x256xf32>
    %51 = arith.subf %38, %50 : vector<4x256xf32>
    %cst_27 = arith.constant 9.99999997E-7 : f32
    %52 = vector.broadcast %cst_27 : f32 to vector<1x256xf32>
    %53 = arith.addf %49, %52 : vector<1x256xf32>
    %54 = math.rsqrt %53 : vector<1x256xf32>
    %55 = vector.broadcast %54 : vector<1x256xf32> to vector<4x256xf32>
    %56 = arith.mulf %51, %55 : vector<4x256xf32>
    %57 = vector.broadcast %1 : vector<4x1xf32> to vector<4x256xf32>
    %58 = arith.mulf %56, %57 : vector<4x256xf32>
    %59 = vector.broadcast %2 : vector<4x1xf32> to vector<4x256xf32>
    %60 = arith.addf %58, %59 : vector<4x256xf32>
    %61 = arith.truncf %60 : vector<4x256xf32> to vector<4x256xbf16>
    %cst_28 = arith.constant dense<0.000000e+00> : vector<8x256xf32>
    %62 = tpu.matmul %31, %61, %cst_28 {dimension_numbers = #tpu.dot_dimension_numbers<[1], [0], [0], [1], [0, 0, 1, 1], [], []>} : vector<8x4xbf16>, vector<4x256xbf16>, vector<8x256xf32> -> vector<8x256xf32>
    %63 = vector.broadcast %3 : vector<8x1xf32> to vector<8x256xf32>
    %64 = arith.addf %62, %63 : vector<8x256xf32>
    %cst_29 = arith.constant 0.000000e+00 : f32
    %65 = vector.broadcast %cst_29 : f32 to vector<8x256xf32>
    %c17_i32 = arith.constant 17 : i32
    %66 = tpu.dynamic_rotate %64 by %c17_i32 dim 1 : vector<8x256xf32>, i32 -> vector<8x256xf32>
    %67 = vector.broadcast %23 : vector<1x256xf32> to vector<8x256xf32>
    %68 = arith.mulf %66, %67 : vector<8x256xf32>
    %69 = vector.broadcast %14 : vector<8x1xf32> to vector<8x256xf32>
    %70 = arith.mulf %68, %69 : vector<8x256xf32>
    %71 = arith.addf %65, %70 : vector<8x256xf32>
    %c16_i32 = arith.constant 16 : i32
    %72 = tpu.dynamic_rotate %64 by %c16_i32 dim 1 : vector<8x256xf32>, i32 -> vector<8x256xf32>
    %73 = vector.broadcast %24 : vector<1x256xf32> to vector<8x256xf32>
    %74 = arith.mulf %72, %73 : vector<8x256xf32>
    %75 = vector.broadcast %15 : vector<8x1xf32> to vector<8x256xf32>
    %76 = arith.mulf %74, %75 : vector<8x256xf32>
    %77 = arith.addf %71, %76 : vector<8x256xf32>
    %c15_i32 = arith.constant 15 : i32
    %78 = tpu.dynamic_rotate %64 by %c15_i32 dim 1 : vector<8x256xf32>, i32 -> vector<8x256xf32>
    %79 = vector.broadcast %25 : vector<1x256xf32> to vector<8x256xf32>
    %80 = arith.mulf %78, %79 : vector<8x256xf32>
    %81 = vector.broadcast %16 : vector<8x1xf32> to vector<8x256xf32>
    %82 = arith.mulf %80, %81 : vector<8x256xf32>
    %83 = arith.addf %77, %82 : vector<8x256xf32>
    %c1_i32 = arith.constant 1 : i32
    %84 = tpu.dynamic_rotate %64 by %c1_i32 dim 1 : vector<8x256xf32>, i32 -> vector<8x256xf32>
    %85 = vector.broadcast %26 : vector<1x256xf32> to vector<8x256xf32>
    %86 = arith.mulf %84, %85 : vector<8x256xf32>
    %87 = vector.broadcast %17 : vector<8x1xf32> to vector<8x256xf32>
    %88 = arith.mulf %86, %87 : vector<8x256xf32>
    %89 = arith.addf %83, %88 : vector<8x256xf32>
    %90 = vector.broadcast %18 : vector<8x1xf32> to vector<8x256xf32>
    %91 = arith.mulf %64, %90 : vector<8x256xf32>
    %92 = arith.addf %89, %91 : vector<8x256xf32>
    %c255_i32 = arith.constant 255 : i32
    %93 = tpu.dynamic_rotate %64 by %c255_i32 dim 1 : vector<8x256xf32>, i32 -> vector<8x256xf32>
    %94 = vector.broadcast %27 : vector<1x256xf32> to vector<8x256xf32>
    %95 = arith.mulf %93, %94 : vector<8x256xf32>
    %96 = vector.broadcast %19 : vector<8x1xf32> to vector<8x256xf32>
    %97 = arith.mulf %95, %96 : vector<8x256xf32>
    %98 = arith.addf %92, %97 : vector<8x256xf32>
    %c241_i32 = arith.constant 241 : i32
    %99 = tpu.dynamic_rotate %64 by %c241_i32 dim 1 : vector<8x256xf32>, i32 -> vector<8x256xf32>
    %100 = vector.broadcast %28 : vector<1x256xf32> to vector<8x256xf32>
    %101 = arith.mulf %99, %100 : vector<8x256xf32>
    %102 = vector.broadcast %20 : vector<8x1xf32> to vector<8x256xf32>
    %103 = arith.mulf %101, %102 : vector<8x256xf32>
    %104 = arith.addf %98, %103 : vector<8x256xf32>
    %c240_i32 = arith.constant 240 : i32
    %105 = tpu.dynamic_rotate %64 by %c240_i32 dim 1 : vector<8x256xf32>, i32 -> vector<8x256xf32>
    %106 = vector.broadcast %29 : vector<1x256xf32> to vector<8x256xf32>
    %107 = arith.mulf %105, %106 : vector<8x256xf32>
    %108 = vector.broadcast %21 : vector<8x1xf32> to vector<8x256xf32>
    %109 = arith.mulf %107, %108 : vector<8x256xf32>
    %110 = arith.addf %104, %109 : vector<8x256xf32>
    %c239_i32 = arith.constant 239 : i32
    %111 = tpu.dynamic_rotate %64 by %c239_i32 dim 1 : vector<8x256xf32>, i32 -> vector<8x256xf32>
    %112 = vector.broadcast %30 : vector<1x256xf32> to vector<8x256xf32>
    %113 = arith.mulf %111, %112 : vector<8x256xf32>
    %114 = vector.broadcast %22 : vector<8x1xf32> to vector<8x256xf32>
    %115 = arith.mulf %113, %114 : vector<8x256xf32>
    %116 = arith.addf %110, %115 : vector<8x256xf32>
    %117 = vector.broadcast %4 : vector<8x1xf32> to vector<8x256xf32>
    %118 = arith.addf %116, %117 : vector<8x256xf32>
    %119 = vector.extract_strided_slice %118 {offsets = [0, 0], sizes = [4, 256], strides = [1, 1]} : vector<8x256xf32> to vector<4x256xf32>
    %120 = vector.extract_strided_slice %118 {offsets = [4, 0], sizes = [4, 256], strides = [1, 1]} : vector<8x256xf32> to vector<4x256xf32>
    %121 = arith.mulf %119, %120 : vector<4x256xf32>
    %cst_30 = arith.constant dense<0.000000e+00> : vector<4x1xf32>
    %122 = tpu.matmul %121, %36, %cst_30 {dimension_numbers = #tpu.dot_dimension_numbers<[1], [0], [0], [1], [0, 0, 1, 1], [], []>} : vector<4x256xf32>, vector<256x1xf32>, vector<4x1xf32> -> vector<4x1xf32>
    %123 = arith.truncf %122 : vector<4x1xf32> to vector<4x1xbf16>
    %cst_31 = arith.constant dense<0.000000e+00> : vector<4x1xf32>
    %124 = tpu.matmul %35, %123, %cst_31 {dimension_numbers = #tpu.dot_dimension_numbers<[1], [0], [0], [1], [0, 0, 1, 1], [], []>} : vector<4x4xbf16>, vector<4x1xbf16>, vector<4x1xf32> -> vector<4x1xf32>
    %125 = arith.addf %124, %5 : vector<4x1xf32>
    %126 = vector.broadcast %125 : vector<4x1xf32> to vector<4x256xf32>
    %127 = arith.mulf %121, %126 : vector<4x256xf32>
    %128 = arith.truncf %127 : vector<4x256xf32> to vector<4x256xbf16>
    %cst_32 = arith.constant dense<0.000000e+00> : vector<4x256xf32>
    %129 = tpu.matmul %33, %128, %cst_32 {dimension_numbers = #tpu.dot_dimension_numbers<[1], [0], [0], [1], [0, 0, 1, 1], [], []>} : vector<4x4xbf16>, vector<4x256xbf16>, vector<4x256xf32> -> vector<4x256xf32>
    %130 = vector.broadcast %6 : vector<4x1xf32> to vector<4x256xf32>
    %131 = arith.addf %129, %130 : vector<4x256xf32>
    %132 = vector.broadcast %11 : vector<4x1xf32> to vector<4x256xf32>
    %133 = arith.mulf %131, %132 : vector<4x256xf32>
    %134 = arith.addf %38, %133 : vector<4x256xf32>
    %cst_33 = arith.constant dense<0.000000e+00> : vector<256xf32>
    %135 = vector.multi_reduction <add>, %134, %cst_33 [0] : vector<4x256xf32> to vector<256xf32>
    %136 = vector.shape_cast %135 : vector<256xf32> to vector<1x256xf32>
    %cst_34 = arith.constant 4.000000e+00 : f32
    %137 = vector.broadcast %cst_34 : f32 to vector<1x256xf32>
    %138 = arith.divf %136, %137 : vector<1x256xf32>
    %139 = vector.broadcast %138 : vector<1x256xf32> to vector<4x256xf32>
    %140 = arith.subf %134, %139 : vector<4x256xf32>
    %141 = arith.mulf %140, %140 : vector<4x256xf32>
    %cst_35 = arith.constant dense<0.000000e+00> : vector<256xf32>
    %142 = vector.multi_reduction <add>, %141, %cst_35 [0] : vector<4x256xf32> to vector<256xf32>
    %143 = vector.shape_cast %142 : vector<256xf32> to vector<1x256xf32>
    %cst_36 = arith.constant 4.000000e+00 : f32
    %144 = vector.broadcast %cst_36 : f32 to vector<1x256xf32>
    %145 = arith.divf %143, %144 : vector<1x256xf32>
    %146 = vector.broadcast %138 : vector<1x256xf32> to vector<4x256xf32>
    %147 = arith.subf %134, %146 : vector<4x256xf32>
    %cst_37 = arith.constant 9.99999997E-7 : f32
    %148 = vector.broadcast %cst_37 : f32 to vector<1x256xf32>
    %149 = arith.addf %145, %148 : vector<1x256xf32>
    %150 = math.rsqrt %149 : vector<1x256xf32>
    %151 = vector.broadcast %150 : vector<1x256xf32> to vector<4x256xf32>
    %152 = arith.mulf %147, %151 : vector<4x256xf32>
    %153 = vector.broadcast %7 : vector<4x1xf32> to vector<4x256xf32>
    %154 = arith.mulf %152, %153 : vector<4x256xf32>
    %155 = vector.broadcast %8 : vector<4x1xf32> to vector<4x256xf32>
    %156 = arith.addf %154, %155 : vector<4x256xf32>
    %157 = arith.truncf %156 : vector<4x256xf32> to vector<4x256xbf16>
    %cst_38 = arith.constant dense<0.000000e+00> : vector<8x256xf32>
    %158 = tpu.matmul %32, %157, %cst_38 {dimension_numbers = #tpu.dot_dimension_numbers<[1], [0], [0], [1], [0, 0, 1, 1], [], []>} : vector<8x4xbf16>, vector<4x256xbf16>, vector<8x256xf32> -> vector<8x256xf32>
    %159 = vector.broadcast %9 : vector<8x1xf32> to vector<8x256xf32>
    %160 = arith.addf %158, %159 : vector<8x256xf32>
    %161 = vector.extract_strided_slice %160 {offsets = [0, 0], sizes = [4, 256], strides = [1, 1]} : vector<8x256xf32> to vector<4x256xf32>
    %162 = vector.extract_strided_slice %160 {offsets = [4, 0], sizes = [4, 256], strides = [1, 1]} : vector<8x256xf32> to vector<4x256xf32>
    %163 = arith.mulf %161, %162 : vector<4x256xf32>
    %164 = vector.broadcast %13 : vector<4x1xf32> to vector<4x256xf32>
    %165 = arith.mulf %163, %164 : vector<4x256xf32>
    %cst_39 = arith.constant dense<0.000000e+00> : vector<256xf32>
    %166 = vector.multi_reduction <add>, %165, %cst_39 [0] : vector<4x256xf32> to vector<256xf32>
    %167 = vector.shape_cast %166 : vector<256xf32> to vector<1x256xf32>
    %168 = arith.mulf %163, %163 : vector<4x256xf32>
    %cst_40 = arith.constant dense<0.000000e+00> : vector<256xf32>
    %169 = vector.multi_reduction <add>, %168, %cst_40 [0] : vector<4x256xf32> to vector<256xf32>
    %170 = vector.shape_cast %169 : vector<256xf32> to vector<1x256xf32>
    %cst_41 = arith.constant 9.99999996E-13 : f32
    %171 = vector.broadcast %cst_41 : f32 to vector<1x256xf32>
    %172 = arith.maximumf %170, %171 : vector<1x256xf32>
    %173 = math.rsqrt %172 : vector<1x256xf32>
    %174 = arith.mulf %167, %173 : vector<1x256xf32>
    %175 = vector.broadcast %174 : vector<1x256xf32> to vector<4x256xf32>
    %176 = arith.mulf %163, %175 : vector<4x256xf32>
    %177 = arith.truncf %176 : vector<4x256xf32> to vector<4x256xbf16>
    %cst_42 = arith.constant dense<0.000000e+00> : vector<4x256xf32>
    %178 = tpu.matmul %34, %177, %cst_42 {dimension_numbers = #tpu.dot_dimension_numbers<[1], [0], [0], [1], [0, 0, 1, 1], [], []>} : vector<4x4xbf16>, vector<4x256xbf16>, vector<4x256xf32> -> vector<4x256xf32>
    %179 = vector.broadcast %10 : vector<4x1xf32> to vector<4x256xf32>
    %180 = arith.addf %178, %179 : vector<4x256xf32>
    %181 = vector.broadcast %12 : vector<4x1xf32> to vector<4x256xf32>
    %182 = arith.mulf %180, %181 : vector<4x256xf32>
    %183 = arith.addf %134, %182 : vector<4x256xf32>
    %c0_43 = arith.constant 0 : index
    %c0_44 = arith.constant 0 : index
    %c0_45 = arith.constant 0 : index
    %184 = vector.load %arg9[%c0_43, %c0_44, %c0_45] : memref<2x4x256xf32, #tpu.memory_space<vmem>>, vector<1x4x256xf32>
    %185 = vector.shape_cast %184 : vector<1x4x256xf32> to vector<4x256xf32>
    %186 = vector.shape_cast %183 : vector<4x256xf32> to vector<1x4x256xf32>
    tpu.vector_store %arg9[%c0_43, %c0_44, %c0_45], %186 {strides = array<i32>} : memref<2x4x256xf32, #tpu.memory_space<vmem>>, vector<1x4x256xf32>,
    %c1_46 = arith.constant 1 : index
    %c0_47 = arith.constant 0 : index
    %c0_48 = arith.constant 0 : index
    %187 = vector.load %arg1[%c1_46, %c0_47, %c0_48] : memref<2x4x256xf32, #tpu.memory_space<vmem>>, vector<1x4x256xf32>
    %188 = vector.shape_cast %187 : vector<1x4x256xf32> to vector<4x256xf32>
    %cst_49 = arith.constant dense<0.000000e+00> : vector<256xf32>
    %189 = vector.multi_reduction <add>, %188, %cst_49 [0] : vector<4x256xf32> to vector<256xf32>
    %190 = vector.shape_cast %189 : vector<256xf32> to vector<1x256xf32>
    %cst_50 = arith.constant 4.000000e+00 : f32
    %191 = vector.broadcast %cst_50 : f32 to vector<1x256xf32>
    %192 = arith.divf %190, %191 : vector<1x256xf32>
    %193 = vector.broadcast %192 : vector<1x256xf32> to vector<4x256xf32>
    %194 = arith.subf %188, %193 : vector<4x256xf32>
    %195 = arith.mulf %194, %194 : vector<4x256xf32>
    %cst_51 = arith.constant dense<0.000000e+00> : vector<256xf32>
    %196 = vector.multi_reduction <add>, %195, %cst_51 [0] : vector<4x256xf32> to vector<256xf32>
    %197 = vector.shape_cast %196 : vector<256xf32> to vector<1x256xf32>
    %cst_52 = arith.constant 4.000000e+00 : f32
    %198 = vector.broadcast %cst_52 : f32 to vector<1x256xf32>
    %199 = arith.divf %197, %198 : vector<1x256xf32>
    %200 = vector.broadcast %192 : vector<1x256xf32> to vector<4x256xf32>
    %201 = arith.subf %188, %200 : vector<4x256xf32>
    %cst_53 = arith.constant 9.99999997E-7 : f32
    %202 = vector.broadcast %cst_53 : f32 to vector<1x256xf32>
    %203 = arith.addf %199, %202 : vector<1x256xf32>
    %204 = math.rsqrt %203 : vector<1x256xf32>
    %205 = vector.broadcast %204 : vector<1x256xf32> to vector<4x256xf32>
    %206 = arith.mulf %201, %205 : vector<4x256xf32>
    %207 = vector.broadcast %1 : vector<4x1xf32> to vector<4x256xf32>
    %208 = arith.mulf %206, %207 : vector<4x256xf32>
    %209 = vector.broadcast %2 : vector<4x1xf32> to vector<4x256xf32>
    %210 = arith.addf %208, %209 : vector<4x256xf32>
    %211 = arith.truncf %210 : vector<4x256xf32> to vector<4x256xbf16>
    %cst_54 = arith.constant dense<0.000000e+00> : vector<8x256xf32>
    %212 = tpu.matmul %31, %211, %cst_54 {dimension_numbers = #tpu.dot_dimension_numbers<[1], [0], [0], [1], [0, 0, 1, 1], [], []>} : vector<8x4xbf16>, vector<4x256xbf16>, vector<8x256xf32> -> vector<8x256xf32>
    %213 = vector.broadcast %3 : vector<8x1xf32> to vector<8x256xf32>
    %214 = arith.addf %212, %213 : vector<8x256xf32>
    %cst_55 = arith.constant 0.000000e+00 : f32
    %215 = vector.broadcast %cst_55 : f32 to vector<8x256xf32>
    %c17_i32_56 = arith.constant 17 : i32
    %216 = tpu.dynamic_rotate %214 by %c17_i32_56 dim 1 : vector<8x256xf32>, i32 -> vector<8x256xf32>
    %217 = vector.broadcast %23 : vector<1x256xf32> to vector<8x256xf32>
    %218 = arith.mulf %216, %217 : vector<8x256xf32>
    %219 = vector.broadcast %14 : vector<8x1xf32> to vector<8x256xf32>
    %220 = arith.mulf %218, %219 : vector<8x256xf32>
    %221 = arith.addf %215, %220 : vector<8x256xf32>
    %c16_i32_57 = arith.constant 16 : i32
    %222 = tpu.dynamic_rotate %214 by %c16_i32_57 dim 1 : vector<8x256xf32>, i32 -> vector<8x256xf32>
    %223 = vector.broadcast %24 : vector<1x256xf32> to vector<8x256xf32>
    %224 = arith.mulf %222, %223 : vector<8x256xf32>
    %225 = vector.broadcast %15 : vector<8x1xf32> to vector<8x256xf32>
    %226 = arith.mulf %224, %225 : vector<8x256xf32>
    %227 = arith.addf %221, %226 : vector<8x256xf32>
    %c15_i32_58 = arith.constant 15 : i32
    %228 = tpu.dynamic_rotate %214 by %c15_i32_58 dim 1 : vector<8x256xf32>, i32 -> vector<8x256xf32>
    %229 = vector.broadcast %25 : vector<1x256xf32> to vector<8x256xf32>
    %230 = arith.mulf %228, %229 : vector<8x256xf32>
    %231 = vector.broadcast %16 : vector<8x1xf32> to vector<8x256xf32>
    %232 = arith.mulf %230, %231 : vector<8x256xf32>
    %233 = arith.addf %227, %232 : vector<8x256xf32>
    %c1_i32_59 = arith.constant 1 : i32
    %234 = tpu.dynamic_rotate %214 by %c1_i32_59 dim 1 : vector<8x256xf32>, i32 -> vector<8x256xf32>
    %235 = vector.broadcast %26 : vector<1x256xf32> to vector<8x256xf32>
    %236 = arith.mulf %234, %235 : vector<8x256xf32>
    %237 = vector.broadcast %17 : vector<8x1xf32> to vector<8x256xf32>
    %238 = arith.mulf %236, %237 : vector<8x256xf32>
    %239 = arith.addf %233, %238 : vector<8x256xf32>
    %240 = vector.broadcast %18 : vector<8x1xf32> to vector<8x256xf32>
    %241 = arith.mulf %214, %240 : vector<8x256xf32>
    %242 = arith.addf %239, %241 : vector<8x256xf32>
    %c255_i32_60 = arith.constant 255 : i32
    %243 = tpu.dynamic_rotate %214 by %c255_i32_60 dim 1 : vector<8x256xf32>, i32 -> vector<8x256xf32>
    %244 = vector.broadcast %27 : vector<1x256xf32> to vector<8x256xf32>
    %245 = arith.mulf %243, %244 : vector<8x256xf32>
    %246 = vector.broadcast %19 : vector<8x1xf32> to vector<8x256xf32>
    %247 = arith.mulf %245, %246 : vector<8x256xf32>
    %248 = arith.addf %242, %247 : vector<8x256xf32>
    %c241_i32_61 = arith.constant 241 : i32
    %249 = tpu.dynamic_rotate %214 by %c241_i32_61 dim 1 : vector<8x256xf32>, i32 -> vector<8x256xf32>
    %250 = vector.broadcast %28 : vector<1x256xf32> to vector<8x256xf32>
    %251 = arith.mulf %249, %250 : vector<8x256xf32>
    %252 = vector.broadcast %20 : vector<8x1xf32> to vector<8x256xf32>
    %253 = arith.mulf %251, %252 : vector<8x256xf32>
    %254 = arith.addf %248, %253 : vector<8x256xf32>
    %c240_i32_62 = arith.constant 240 : i32
    %255 = tpu.dynamic_rotate %214 by %c240_i32_62 dim 1 : vector<8x256xf32>, i32 -> vector<8x256xf32>
    %256 = vector.broadcast %29 : vector<1x256xf32> to vector<8x256xf32>
    %257 = arith.mulf %255, %256 : vector<8x256xf32>
    %258 = vector.broadcast %21 : vector<8x1xf32> to vector<8x256xf32>
    %259 = arith.mulf %257, %258 : vector<8x256xf32>
    %260 = arith.addf %254, %259 : vector<8x256xf32>
    %c239_i32_63 = arith.constant 239 : i32
    %261 = tpu.dynamic_rotate %214 by %c239_i32_63 dim 1 : vector<8x256xf32>, i32 -> vector<8x256xf32>
    %262 = vector.broadcast %30 : vector<1x256xf32> to vector<8x256xf32>
    %263 = arith.mulf %261, %262 : vector<8x256xf32>
    %264 = vector.broadcast %22 : vector<8x1xf32> to vector<8x256xf32>
    %265 = arith.mulf %263, %264 : vector<8x256xf32>
    %266 = arith.addf %260, %265 : vector<8x256xf32>
    %267 = vector.broadcast %4 : vector<8x1xf32> to vector<8x256xf32>
    %268 = arith.addf %266, %267 : vector<8x256xf32>
    %269 = vector.extract_strided_slice %268 {offsets = [0, 0], sizes = [4, 256], strides = [1, 1]} : vector<8x256xf32> to vector<4x256xf32>
    %270 = vector.extract_strided_slice %268 {offsets = [4, 0], sizes = [4, 256], strides = [1, 1]} : vector<8x256xf32> to vector<4x256xf32>
    %271 = arith.mulf %269, %270 : vector<4x256xf32>
    %cst_64 = arith.constant dense<0.000000e+00> : vector<4x1xf32>
    %272 = tpu.matmul %271, %36, %cst_64 {dimension_numbers = #tpu.dot_dimension_numbers<[1], [0], [0], [1], [0, 0, 1, 1], [], []>} : vector<4x256xf32>, vector<256x1xf32>, vector<4x1xf32> -> vector<4x1xf32>
    %273 = arith.truncf %272 : vector<4x1xf32> to vector<4x1xbf16>
    %cst_65 = arith.constant dense<0.000000e+00> : vector<4x1xf32>
    %274 = tpu.matmul %35, %273, %cst_65 {dimension_numbers = #tpu.dot_dimension_numbers<[1], [0], [0], [1], [0, 0, 1, 1], [], []>} : vector<4x4xbf16>, vector<4x1xbf16>, vector<4x1xf32> -> vector<4x1xf32>
    %275 = arith.addf %274, %5 : vector<4x1xf32>
    %276 = vector.broadcast %275 : vector<4x1xf32> to vector<4x256xf32>
    %277 = arith.mulf %271, %276 : vector<4x256xf32>
    %278 = arith.truncf %277 : vector<4x256xf32> to vector<4x256xbf16>
    %cst_66 = arith.constant dense<0.000000e+00> : vector<4x256xf32>
    %279 = tpu.matmul %33, %278, %cst_66 {dimension_numbers = #tpu.dot_dimension_numbers<[1], [0], [0], [1], [0, 0, 1, 1], [], []>} : vector<4x4xbf16>, vector<4x256xbf16>, vector<4x256xf32> -> vector<4x256xf32>
    %280 = vector.broadcast %6 : vector<4x1xf32> to vector<4x256xf32>
    %281 = arith.addf %279, %280 : vector<4x256xf32>
    %282 = vector.broadcast %11 : vector<4x1xf32> to vector<4x256xf32>
    %283 = arith.mulf %281, %282 : vector<4x256xf32>
    %284 = arith.addf %188, %283 : vector<4x256xf32>
    %cst_67 = arith.constant dense<0.000000e+00> : vector<256xf32>
    %285 = vector.multi_reduction <add>, %284, %cst_67 [0] : vector<4x256xf32> to vector<256xf32>
    %286 = vector.shape_cast %285 : vector<256xf32> to vector<1x256xf32>
    %cst_68 = arith.constant 4.000000e+00 : f32
    %287 = vector.broadcast %cst_68 : f32 to vector<1x256xf32>
    %288 = arith.divf %286, %287 : vector<1x256xf32>
    %289 = vector.broadcast %288 : vector<1x256xf32> to vector<4x256xf32>
    %290 = arith.subf %284, %289 : vector<4x256xf32>
    %291 = arith.mulf %290, %290 : vector<4x256xf32>
    %cst_69 = arith.constant dense<0.000000e+00> : vector<256xf32>
    %292 = vector.multi_reduction <add>, %291, %cst_69 [0] : vector<4x256xf32> to vector<256xf32>
    %293 = vector.shape_cast %292 : vector<256xf32> to vector<1x256xf32>
    %cst_70 = arith.constant 4.000000e+00 : f32
    %294 = vector.broadcast %cst_70 : f32 to vector<1x256xf32>
    %295 = arith.divf %293, %294 : vector<1x256xf32>
    %296 = vector.broadcast %288 : vector<1x256xf32> to vector<4x256xf32>
    %297 = arith.subf %284, %296 : vector<4x256xf32>
    %cst_71 = arith.constant 9.99999997E-7 : f32
    %298 = vector.broadcast %cst_71 : f32 to vector<1x256xf32>
    %299 = arith.addf %295, %298 : vector<1x256xf32>
    %300 = math.rsqrt %299 : vector<1x256xf32>
    %301 = vector.broadcast %300 : vector<1x256xf32> to vector<4x256xf32>
    %302 = arith.mulf %297, %301 : vector<4x256xf32>
    %303 = vector.broadcast %7 : vector<4x1xf32> to vector<4x256xf32>
    %304 = arith.mulf %302, %303 : vector<4x256xf32>
    %305 = vector.broadcast %8 : vector<4x1xf32> to vector<4x256xf32>
    %306 = arith.addf %304, %305 : vector<4x256xf32>
    %307 = arith.truncf %306 : vector<4x256xf32> to vector<4x256xbf16>
    %cst_72 = arith.constant dense<0.000000e+00> : vector<8x256xf32>
    %308 = tpu.matmul %32, %307, %cst_72 {dimension_numbers = #tpu.dot_dimension_numbers<[1], [0], [0], [1], [0, 0, 1, 1], [], []>} : vector<8x4xbf16>, vector<4x256xbf16>, vector<8x256xf32> -> vector<8x256xf32>
    %309 = vector.broadcast %9 : vector<8x1xf32> to vector<8x256xf32>
    %310 = arith.addf %308, %309 : vector<8x256xf32>
    %311 = vector.extract_strided_slice %310 {offsets = [0, 0], sizes = [4, 256], strides = [1, 1]} : vector<8x256xf32> to vector<4x256xf32>
    %312 = vector.extract_strided_slice %310 {offsets = [4, 0], sizes = [4, 256], strides = [1, 1]} : vector<8x256xf32> to vector<4x256xf32>
    %313 = arith.mulf %311, %312 : vector<4x256xf32>
    %314 = vector.broadcast %13 : vector<4x1xf32> to vector<4x256xf32>
    %315 = arith.mulf %313, %314 : vector<4x256xf32>
    %cst_73 = arith.constant dense<0.000000e+00> : vector<256xf32>
    %316 = vector.multi_reduction <add>, %315, %cst_73 [0] : vector<4x256xf32> to vector<256xf32>
    %317 = vector.shape_cast %316 : vector<256xf32> to vector<1x256xf32>
    %318 = arith.mulf %313, %313 : vector<4x256xf32>
    %cst_74 = arith.constant dense<0.000000e+00> : vector<256xf32>
    %319 = vector.multi_reduction <add>, %318, %cst_74 [0] : vector<4x256xf32> to vector<256xf32>
    %320 = vector.shape_cast %319 : vector<256xf32> to vector<1x256xf32>
    %cst_75 = arith.constant 9.99999996E-13 : f32
    %321 = vector.broadcast %cst_75 : f32 to vector<1x256xf32>
    %322 = arith.maximumf %320, %321 : vector<1x256xf32>
    %323 = math.rsqrt %322 : vector<1x256xf32>
    %324 = arith.mulf %317, %323 : vector<1x256xf32>
    %325 = vector.broadcast %324 : vector<1x256xf32> to vector<4x256xf32>
    %326 = arith.mulf %313, %325 : vector<4x256xf32>
    %327 = arith.truncf %326 : vector<4x256xf32> to vector<4x256xbf16>
    %cst_76 = arith.constant dense<0.000000e+00> : vector<4x256xf32>
    %328 = tpu.matmul %34, %327, %cst_76 {dimension_numbers = #tpu.dot_dimension_numbers<[1], [0], [0], [1], [0, 0, 1, 1], [], []>} : vector<4x4xbf16>, vector<4x256xbf16>, vector<4x256xf32> -> vector<4x256xf32>
    %329 = vector.broadcast %10 : vector<4x1xf32> to vector<4x256xf32>
    %330 = arith.addf %328, %329 : vector<4x256xf32>
    %331 = vector.broadcast %12 : vector<4x1xf32> to vector<4x256xf32>
    %332 = arith.mulf %330, %331 : vector<4x256xf32>
    %333 = arith.addf %284, %332 : vector<4x256xf32>
    %c1_77 = arith.constant 1 : index
    %c0_78 = arith.constant 0 : index
    %c0_79 = arith.constant 0 : index
    %334 = vector.load %arg9[%c1_77, %c0_78, %c0_79] : memref<2x4x256xf32, #tpu.memory_space<vmem>>, vector<1x4x256xf32>
    %335 = vector.shape_cast %334 : vector<1x4x256xf32> to vector<4x256xf32>
    %336 = vector.shape_cast %333 : vector<4x256xf32> to vector<1x4x256xf32>
    tpu.vector_store %arg9[%c1_77, %c0_78, %c0_79], %336 {strides = array<i32>} : memref<2x4x256xf32, #tpu.memory_space<vmem>>, vector<1x4x256xf32>,
    return
  }
  func.func @transform_0(%arg0: i32) -> (i32, i32, i32) {
    %c0_i32 = arith.constant 0 : i32
    %c0_i32_0 = arith.constant 0 : i32
    %c0_i32_1 = arith.constant 0 : i32
    return %arg0, %c0_i32, %c0_i32_0 : i32, i32, i32
  }
  func.func @transform_1(%arg0: i32) -> (i32, i32) {
    %c0_i32 = arith.constant 0 : i32
    %c0_i32_0 = arith.constant 0 : i32
    %c0_i32_1 = arith.constant 0 : i32
    return %c0_i32, %c0_i32_0 : i32, i32
  }
  func.func @transform_2(%arg0: i32) -> (i32, i32) {
    %c0_i32 = arith.constant 0 : i32
    %c0_i32_0 = arith.constant 0 : i32
    %c0_i32_1 = arith.constant 0 : i32
    return %c0_i32, %c0_i32_0 : i32, i32
  }
  func.func @transform_3(%arg0: i32) -> (i32, i32) {
    %c0_i32 = arith.constant 0 : i32
    %c0_i32_0 = arith.constant 0 : i32
    %c0_i32_1 = arith.constant 0 : i32
    return %c0_i32, %c0_i32_0 : i32, i32
  }
  func.func @transform_4(%arg0: i32) -> (i32, i32) {
    %c0_i32 = arith.constant 0 : i32
    %c0_i32_0 = arith.constant 0 : i32
    %c0_i32_1 = arith.constant 0 : i32
    return %c0_i32, %c0_i32_0 : i32, i32
  }
  func.func @transform_5(%arg0: i32) -> (i32, i32) {
    %c0_i32 = arith.constant 0 : i32
    %c0_i32_0 = arith.constant 0 : i32
    %c0_i32_1 = arith.constant 0 : i32
    return %c0_i32, %c0_i32_0 : i32, i32
  }
  func.func @transform_6(%arg0: i32) -> (i32, i32) {
    %c0_i32 = arith.constant 0 : i32
    %c0_i32_0 = arith.constant 0 : i32
    %c0_i32_1 = arith.constant 0 : i32
    return %c0_i32, %c0_i32_0 : i32, i32
  }
  func.func @transform_7(%arg0: i32) -> (i32, i32) {
    %c0_i32 = arith.constant 0 : i32
    %c0_i32_0 = arith.constant 0 : i32
    %c0_i32_1 = arith.constant 0 : i32
    return %c0_i32, %c0_i32_0 : i32, i32
  }
  func.func @transform_8(%arg0: i32) -> (i32, i32, i32) {
    %c0_i32 = arith.constant 0 : i32
    %c0_i32_0 = arith.constant 0 : i32
    %c0_i32_1 = arith.constant 0 : i32
    return %arg0, %c0_i32, %c0_i32_0 : i32, i32, i32
  }
}

</mosaic_0001>

<llo_original>
// kernel: tpu_custom_call.1
$region0: #{tpu_custom_call.1}
  #allocation0 [shape = 'u32[]', space=smem, size = 0x4, offset = 0x4, fixed_abs, tag = 'smem constant byte address 0x4 - core index']
  #allocation1 [shape = 'u32[144,128]{1,0:T(1,128)}', space=vmem, size = 0x12000, scoped, tag = 'internal scratch']
  %s0 = inlined_call_operand.hbm [shape: f32[2,4,256], index: 0, kind: input, shape index: {}]
  %s1 = inlined_call_operand.vmem [shape: bf16[8,4], index: 1, kind: input, shape index: {}]
  %s2 = inlined_call_operand.vmem [shape: bf16[8,4], index: 2, kind: input, shape index: {}]
  %s3 = inlined_call_operand.vmem [shape: bf16[4,4], index: 3, kind: input, shape index: {}]
  %s4 = inlined_call_operand.vmem [shape: bf16[4,4], index: 4, kind: input, shape index: {}]
  %s5 = inlined_call_operand.vmem [shape: bf16[4,4], index: 5, kind: input, shape index: {}]
  %s6 = inlined_call_operand.hbm [shape: f32[8,22], index: 6, kind: input, shape index: {}]
  %s7 = inlined_call_operand.vmem [shape: f32[9,256], index: 7, kind: input, shape index: {}]
  %s8 = inlined_call_operand.hbm [shape: f32[2,4,256], index: 8, kind: output, shape index: {}]
  %s9 = sld [smem:[#allocation0]]
  $region50: #{tpu_custom_call.1} parent=0
    _
  %s11 = ssub.s32 1, %s9
  %s12 = scalar_select 0, %s11, %s9
  $region1: #{tpu_custom_call.1} parent=0
    #allocation2 [shape = 'u8[8192]{0}', space=vmem, size = 0x2000, scoped, tag = 'input window, operand 0, single buffered']
    #allocation3 [shape = 's32[1]{0}', space=sflag, size = 0x4, scoped, tag = 'scoped memory for tpu_custom_call.1']
    #allocation4 [shape = 's32[1]{0}', space=sflag, size = 0x4, scoped, tag = 'scoped memory for tpu_custom_call.1']
    #allocation5 [shape = 'u8[4096]{0}', space=vmem, size = 0x1000, scoped, tag = 'input window, operand 6, single buffered']
    #allocation6 [shape = 's32[1]{0}', space=sflag, size = 0x4, scoped, tag = 'scoped memory for tpu_custom_call.1']
    #allocation7 [shape = 'u8[8192]{0}', space=vmem, size = 0x2000, scoped, tag = 'output window, operand 0, single buffered']
    %13 = vsyncpa [#allocation3], 0
    %14 = vsyncpa [#allocation6], 0
    %15 = vsyncpa [#allocation4], 0
    // Predicated region
    $region2: #{tpu_custom_call.1} parent=1 // pred_check
      _
    $region3: #{tpu_custom_call.1} parent=1 // pred_check_branch
      %17 = sbr.rel (0) target = $region5
    $region4: #{tpu_custom_call.1} parent=1 // pred_region
      %s19 = ssub.s32 256, 256
      %20 = vsyncadd [#allocation3], %s19
      %s21 = sshll.u32 [#allocation2], 4
      %s22 = int_to_ptr.vmem [resolvable:$true] %s21
      %27 = dma.hbm_to_vmem [thread:$0]  %s0, 256, %s22, [#allocation3], 128, 128, 8
    $region5: #{tpu_custom_call.1} parent=1 // pred_fallthru
      _
    // Predicated region
    $region6: #{tpu_custom_call.1} parent=1 // pred_check
      _
    $region7: #{tpu_custom_call.1} parent=1 // pred_check_branch
      %29 = sbr.rel (0) target = $region9
    $region8: #{tpu_custom_call.1} parent=1 // pred_region
      _
    $region9: #{tpu_custom_call.1} parent=1 // pred_fallthru
      _
    // Predicated region
    $region10: #{tpu_custom_call.1} parent=1 // pred_check
      _
    $region11: #{tpu_custom_call.1} parent=1 // pred_check_branch
      %31 = sbr.rel (0) target = $region13
    $region12: #{tpu_custom_call.1} parent=1 // pred_region
      _
    $region13: #{tpu_custom_call.1} parent=1 // pred_fallthru
      _
    // Predicated region
    $region14: #{tpu_custom_call.1} parent=1 // pred_check
      _
    $region15: #{tpu_custom_call.1} parent=1 // pred_check_branch
      %33 = sbr.rel (0) target = $region17
    $region16: #{tpu_custom_call.1} parent=1 // pred_region
      _
    $region17: #{tpu_custom_call.1} parent=1 // pred_fallthru
      _
    // Predicated region
    $region18: #{tpu_custom_call.1} parent=1 // pred_check
      _
    $region19: #{tpu_custom_call.1} parent=1 // pred_check_branch
      %35 = sbr.rel (0) target = $region21
    $region20: #{tpu_custom_call.1} parent=1 // pred_region
      _
    $region21: #{tpu_custom_call.1} parent=1 // pred_fallthru
      _
    // Predicated region
    $region22: #{tpu_custom_call.1} parent=1 // pred_check
      _
    $region23: #{tpu_custom_call.1} parent=1 // pred_check_branch
      %37 = sbr.rel (0) target = $region25
    $region24: #{tpu_custom_call.1} parent=1 // pred_region
      _
    $region25: #{tpu_custom_call.1} parent=1 // pred_fallthru
      _
    // Predicated region
    $region26: #{tpu_custom_call.1} parent=1 // pred_check
      _
    $region27: #{tpu_custom_call.1} parent=1 // pred_check_branch
      %39 = sbr.rel (0) target = $region29
    $region28: #{tpu_custom_call.1} parent=1 // pred_region
      %s41 = ssub.s32 128, 128
      %42 = vsyncadd [#allocation6], %s41
      %s44 = sshll.u32 [#allocation5], 4
      %s45 = int_to_ptr.vmem [resolvable:$true] %s44
      %47 = dma.hbm_to_vmem [thread:$0]  %s6, 128, %s45, [#allocation6]
    $region29: #{tpu_custom_call.1} parent=1 // pred_fallthru
      _
    // Predicated region
    $region30: #{tpu_custom_call.1} parent=1 // pred_check
      _
    $region31: #{tpu_custom_call.1} parent=1 // pred_check_branch
      %49 = sbr.rel (0) target = $region33
    $region32: #{tpu_custom_call.1} parent=1 // pred_region
      _
    $region33: #{tpu_custom_call.1} parent=1 // pred_fallthru
      _
    // Predicated region
    $region34: #{tpu_custom_call.1} parent=1 // pred_check
      _
    $region35: #{tpu_custom_call.1} parent=1 // pred_check_branch
      %51 = sbr.rel (0) target = $region37
    $region36: #{tpu_custom_call.1} parent=1 // pred_region
      %52 = dma.done [#allocation3], 256
    $region37: #{tpu_custom_call.1} parent=1 // pred_fallthru
      _
    // Predicated region
    $region38: #{tpu_custom_call.1} parent=1 // pred_check
      _
    $region39: #{tpu_custom_call.1} parent=1 // pred_check_branch
      %54 = sbr.rel (0) target = $region41
    $region40: #{tpu_custom_call.1} parent=1 // pred_region
      %55 = dma.done [#allocation6], 128
    $region41: #{tpu_custom_call.1} parent=1 // pred_fallthru
      _
    %v57 = vld [vmem:[#allocation5] sm:$0xff]
    %v58 = vld [vmem:[%s7] ss:$8 sm:$0x3]
    %s59 = scalar_lea.vmem %s7, 1
    %v60 = vld [vmem:[%s59] ss:$8 sm:$0x3]
    %s61 = scalar_lea.vmem %s7, 2
    %v62 = vld [vmem:[%s61] ss:$8 sm:$0x3]
    %s63 = scalar_lea.vmem %s7, 3
    %v64 = vld [vmem:[%s63] ss:$8 sm:$0x3]
    %s65 = scalar_lea.vmem %s7, 5
    %v66 = vld [vmem:[%s65] ss:$8 sm:$0x3]
    %s67 = scalar_lea.vmem %s7, 6
    %v68 = vld [vmem:[%s67] ss:$8 sm:$0x3]
    %s69 = scalar_lea.vmem %s7, 7
    %v70 = vld [vmem:[%s69] ss:$8 sm:$0x3]
    %s71 = scalar_lea.vmem %s7, 16
    %v72 = vld [vmem:[%s71] ss:$8 sm:$0x3]
    %v73 = vld [vmem:[%s1] sm:$0xf]
    %v74 = vld [vmem:[%s2] sm:$0xf]
    %v75 = vld [vmem:[%s3] sm:$0x3]
    %v76 = vld [vmem:[%s4] sm:$0x3]
    %v77 = vld [vmem:[%s5] sm:$0x3]
    %v78 = vld [vmem:[#allocation2] sm:$0xff]
    %v80 = vcombine.high %v78, %v78
    %vm82 = vcmask 1043456
    %v83 = vsel %vm82, %v78, 0.0
    %v84 = vrot.slane %v83, 4
    %v85 = vadd.f32 %v83, %v84
    %v86 = vrot.slane %v85, 2
    %v87 = vadd.f32 %v85, %v86
    %v88 = vrot.slane %v87, 1
    %v89 = vadd.f32 %v87, %v88
    %v90 = vsel %vm82, %v80, 0.0
    %v91 = vrot.slane %v90, 4
    %v92 = vadd.f32 %v90, %v91
    %v93 = vrot.slane %v92, 2
    %v94 = vadd.f32 %v92, %v93
    %v95 = vrot.slane %v94, 1
    %v96 = vadd.f32 %v94, %v95
    %v97 = vrcp.pop 4.0
    %v98 = vmul.f32 %v89, %v97
    %v99 = vmul.f32 %v96, %v97
    %v102 = vcombine.low %v98, %v99
    %v104 = vsub.f32 %v78, %v102
    %v105 = vmul.f32 %v104, %v104
    %v107 = vcombine.high %v105, %v105
    %v109 = vsel %vm82, %v105, 0.0
    %v110 = vrot.slane %v109, 4
    %v111 = vadd.f32 %v109, %v110
    %v112 = vrot.slane %v111, 2
    %v113 = vadd.f32 %v111, %v112
    %v114 = vrot.slane %v113, 1
    %v115 = vadd.f32 %v113, %v114
    %v116 = vsel %vm82, %v107, 0.0
    %v117 = vrot.slane %v116, 4
    %v118 = vadd.f32 %v116, %v117
    %v119 = vrot.slane %v118, 2
    %v120 = vadd.f32 %v118, %v119
    %v121 = vrot.slane %v120, 1
    %v122 = vadd.f32 %v120, %v121
    %v123 = vmul.f32 %v115, %v97
    %v124 = vmul.f32 %v122, %v97
    %v125 = vadd.f32 %v123, 1e-06
    %v126 = vadd.f32 %v124, 1e-06
    %v127 = vrsqrt.pop %v125
    %v128 = vrsqrt.pop %v126
    %v131 = vcombine.low %v127, %v128
    %v133 = vmul.f32 %v104, %v131
    %135 = vset.pattern.permute.xlu0 0
    %136 = vperm.xlu0 %135, %v57
    %v137 = vpop.permute.xlu0 %136
    %v139 = vunpack.c.l.s4 839922192
    %v140 = vunpack.c.0.s8 %v139
    %v141 = vlaneseq
    %v142 = vshrl.u32 %v141, 7
    %v143 = vsub.s32 %v140, %v142
    %v144 = vrot.slane %v137, %v143
    %v146 = vmul.f32 %v133, %v144
    %147 = vset.pattern.permute.xlu0 1
    %148 = vperm.xlu0 %147, %v57
    %v149 = vpop.permute.xlu0 %148
    %v151 = vunpack.c.l.s4 839922192
    %v152 = vunpack.c.0.s8 %v151
    %v153 = vlaneseq
    %v154 = vshrl.u32 %v153, 7
    %v155 = vsub.s32 %v152, %v154
    %v156 = vrot.slane %v149, %v155
    %v158 = vadd.f32 %v146, %v156
    %v160 = vcombine.high %v158, %v158
    %v162 = vpack.c.bf16 %v158, %v158
    %v163 = vpack.c.bf16 %v160, %v160
    %164 = vset.pattern.permute.xlu0 2
    %165 = vperm.xlu0 %164, %v57
    %v166 = vpop.permute.xlu0 %165
    %vm168 = vcmask 31744
    %v170 = vsel %vm168, %v73, 0
    %vm172 = vcmask 1041408
    %v174 = vsel %vm172, %v162, 0
    %v177 = vsel %vm172, %v163, 0
    %179 = vmatprep.subr.bf16.mxu0 %v177
    %180 = vmatpush1.bf16.msra.mxu0 %v174
    %181 = vmatprep.subr.bf16.mxu0 0
    %182 = vmatpush1.bf16.msra.mxu0 0
    %183 = vmatprep.subr.bf16.mxu0 0
    %184 = vmatpush1.bf16.msra.mxu0 0
    %185 = vmatprep.subr.bf16.mxu0 0
    %186 = vmatpush1.bf16.msra.mxu0 0
    %187 = vmatprep.subr.bf16.mxu0 0
    %188 = vmatpush1.bf16.msra.mxu0 0
    %189 = vmatprep.subr.bf16.mxu0 0
    %190 = vmatpush1.bf16.msra.mxu0 0
    %191 = vmatprep.subr.bf16.mxu0 0
    %192 = vmatpush1.bf16.msra.mxu0 0
    %193 = vmatprep.subr.bf16.mxu0 0
    %194 = vmatpush1.bf16.msra.mxu0 0
    %195 = vmatprep.subr.bf16.mxu0 0
    %196 = vmatpush1.bf16.msra.mxu0 0
    %197 = vmatprep.subr.bf16.mxu0 0
    %198 = vmatpush1.bf16.msra.mxu0 0
    %199 = vmatprep.subr.bf16.mxu0 0
    %200 = vmatpush1.bf16.msra.mxu0 0
    %201 = vmatprep.subr.bf16.mxu0 0
    %202 = vmatpush1.bf16.msra.mxu0 0
    %203 = vmatprep.subr.bf16.mxu0 0
    %204 = vmatpush1.bf16.msra.mxu0 0
    %205 = vmatprep.subr.bf16.mxu0 0
    %206 = vmatpush1.bf16.msra.mxu0 0
    %207 = vmatprep.subr.bf16.mxu0 0
    %208 = vmatpush1.bf16.msra.mxu0 0
    %209 = vmatprep.subr.bf16.mxu0 0
    %210 = vmatpush1.bf16.msra.mxu0 0
    %211 = vmatprep.mubr.bf16.mxu0 0
    %212 = vmatmul.mubr.bf16.gmra.mrb[0].mxu0 %v170
    %v213 = vpop.f32.mrb[0].mxu0
    %v214 = vadd.f32 %v166, %v213
    %v215 = vpop.f32.mrb[0].mxu0
    %v216 = vadd.f32 %v166, %v215
    %v217 = vpop.f32.mrb[0].mxu0
    %v218 = vpop.f32.mrb[0].mxu0
    %219 = vdwg.mxu0
    %220 = vrot.lane.b32.xlu0 %v214, 17
    %v221 = vpop.permute.xlu0 %220
    %222 = vrot.lane.b32.xlu0 %v216, 17
    %v223 = vpop.permute.xlu0 %222
    %v224 = vlaneseq
    %v225 = vand.u32 %v224, 127
    %vm226 = vcmp.lt.s32.totalorder %v225, 17
    %v227 = vsel %vm226, %v221, %v223
    %v228 = vsel %vm226, %v223, %v221
    %v230 = vlaneseq
    %v231 = vshrl.u32 %v230, 7
    %v232 = vsub.s32 0, %v231
    %v233 = vrot.slane %v58, %v232
    %v234 = vlaneseq
    %v235 = vshrl.u32 %v234, 7
    %v236 = vsub.s32 1, %v235
    %v237 = vrot.slane %v58, %v236
    %v240 = vmul.f32 %v228, %v233
    %v241 = vmul.f32 %v227, %v237
    %242 = vset.pattern.permute.xlu0 13
    %243 = vperm.xlu0 %242, %v57
    %v244 = vpop.permute.xlu0 %243
    %v246 = vmul.f32 %v240, %v244
    %v247 = vmul.f32 %v241, %v244
    %v248 = vadd.f32 %v246, 0.0
    %v249 = vadd.f32 %v247, 0.0
    %250 = vrot.lane.b32.xlu0 %v214, 16
    %v251 = vpop.permute.xlu0 %250
    %252 = vrot.lane.b32.xlu0 %v216, 16
    %v253 = vpop.permute.xlu0 %252
    %vm254 = vcmp.lt.s32.totalorder %v225, 16
    %v255 = vsel %vm254, %v251, %v253
    %v256 = vsel %vm254, %v253, %v251
    %v258 = vlaneseq
    %v259 = vshrl.u32 %v258, 7
    %v260 = vsub.s32 0, %v259
    %v261 = vrot.slane %v60, %v260
    %v262 = vlaneseq
    %v263 = vshrl.u32 %v262, 7
    %v264 = vsub.s32 1, %v263
    %v265 = vrot.slane %v60, %v264
    %v268 = vmul.f32 %v256, %v261
    %v269 = vmul.f32 %v255, %v265
    %270 = vset.pattern.permute.xlu0 14
    %271 = vperm.xlu0 %270, %v57
    %v272 = vpop.permute.xlu0 %271
    %v274 = vmul.f32 %v268, %v272
    %v275 = vmul.f32 %v269, %v272
    %v276 = vadd.f32 %v248, %v274
    %v277 = vadd.f32 %v249, %v275
    %278 = vrot.lane.b32.xlu0 %v214, 15
    %v279 = vpop.permute.xlu0 %278
    %280 = vrot.lane.b32.xlu0 %v216, 15
    %v281 = vpop.permute.xlu0 %280
    %vm282 = vcmp.lt.s32.totalorder %v225, 15
    %v283 = vsel %vm282, %v279, %v281
    %v284 = vsel %vm282, %v281, %v279
    %v286 = vlaneseq
    %v287 = vshrl.u32 %v286, 7
    %v288 = vsub.s32 0, %v287
    %v289 = vrot.slane %v62, %v288
    %v290 = vlaneseq
    %v291 = vshrl.u32 %v290, 7
    %v292 = vsub.s32 1, %v291
    %v293 = vrot.slane %v62, %v292
    %v296 = vmul.f32 %v284, %v289
    %v297 = vmul.f32 %v283, %v293
    %298 = vset.pattern.permute.xlu0 15
    %299 = vperm.xlu0 %298, %v57
    %v300 = vpop.permute.xlu0 %299
    %v302 = vmul.f32 %v296, %v300
    %v303 = vmul.f32 %v297, %v300
    %v304 = vadd.f32 %v276, %v302
    %v305 = vadd.f32 %v277, %v303
    %306 = vrot.lane.b32.xlu0 %v214, 1
    %v307 = vpop.permute.xlu0 %306
    %308 = vrot.lane.b32.xlu0 %v216, 1
    %v309 = vpop.permute.xlu0 %308
    %vm310 = vcmp.lt.s32.totalorder %v225, 1
    %v311 = vsel %vm310, %v307, %v309
    %v312 = vsel %vm310, %v309, %v307
    %v314 = vlaneseq
    %v315 = vshrl.u32 %v314, 7
    %v316 = vsub.s32 0, %v315
    %v317 = vrot.slane %v64, %v316
    %v318 = vlaneseq
    %v319 = vshrl.u32 %v318, 7
    %v320 = vsub.s32 1, %v319
    %v321 = vrot.slane %v64, %v320
    %v324 = vmul.f32 %v312, %v317
    %v325 = vmul.f32 %v311, %v321
    %326 = vset.pattern.permute.xlu0 16
    %327 = vperm.xlu0 %326, %v57
    %v328 = vpop.permute.xlu0 %327
    %v330 = vmul.f32 %v324, %v328
    %v331 = vmul.f32 %v325, %v328
    %v332 = vadd.f32 %v304, %v330
    %v333 = vadd.f32 %v305, %v331
    %334 = vset.pattern.permute.xlu0 17
    %335 = vperm.xlu0 %334, %v57
    %v336 = vpop.permute.xlu0 %335
    %v338 = vmul.f32 %v214, %v336
    %v339 = vmul.f32 %v216, %v336
    %v340 = vadd.f32 %v332, %v338
    %v341 = vadd.f32 %v333, %v339
    %342 = vrot.lane.b32.xlu0 %v214, 127
    %v343 = vpop.permute.xlu0 %342
    %344 = vrot.lane.b32.xlu0 %v216, 127
    %v345 = vpop.permute.xlu0 %344
    %vm346 = vcmp.lt.s32.totalorder %v225, 127
    %v347 = vsel %vm346, %v343, %v345
    %v348 = vsel %vm346, %v345, %v343
    %v350 = vlaneseq
    %v351 = vshrl.u32 %v350, 7
    %v352 = vsub.s32 0, %v351
    %v353 = vrot.slane %v66, %v352
    %v354 = vlaneseq
    %v355 = vshrl.u32 %v354, 7
    %v356 = vsub.s32 1, %v355
    %v357 = vrot.slane %v66, %v356
    %v360 = vmul.f32 %v347, %v353
    %v361 = vmul.f32 %v348, %v357
    %362 = vset.pattern.permute.xlu0 18
    %363 = vperm.xlu0 %362, %v57
    %v364 = vpop.permute.xlu0 %363
    %v366 = vmul.f32 %v360, %v364
    %v367 = vmul.f32 %v361, %v364
    %v368 = vadd.f32 %v340, %v366
    %v369 = vadd.f32 %v341, %v367
    %370 = vrot.lane.b32.xlu0 %v214, 113
    %v371 = vpop.permute.xlu0 %370
    %372 = vrot.lane.b32.xlu0 %v216, 113
    %v373 = vpop.permute.xlu0 %372
    %vm374 = vcmp.lt.s32.totalorder %v225, 113
    %v375 = vsel %vm374, %v371, %v373
    %v376 = vsel %vm374, %v373, %v371
    %v378 = vlaneseq
    %v379 = vshrl.u32 %v378, 7
    %v380 = vsub.s32 0, %v379
    %v381 = vrot.slane %v68, %v380
    %v382 = vlaneseq
    %v383 = vshrl.u32 %v382, 7
    %v384 = vsub.s32 1, %v383
    %v385 = vrot.slane %v68, %v384
    %v388 = vmul.f32 %v375, %v381
    %v389 = vmul.f32 %v376, %v385
    %390 = vset.pattern.permute.xlu0 19
    %391 = vperm.xlu0 %390, %v57
    %v392 = vpop.permute.xlu0 %391
    %v394 = vmul.f32 %v388, %v392
    %v395 = vmul.f32 %v389, %v392
    %v396 = vadd.f32 %v368, %v394
    %v397 = vadd.f32 %v369, %v395
    %398 = vrot.lane.b32.xlu0 %v214, 112
    %v399 = vpop.permute.xlu0 %398
    %400 = vrot.lane.b32.xlu0 %v216, 112
    %v401 = vpop.permute.xlu0 %400
    %vm402 = vcmp.lt.s32.totalorder %v225, 112
    %v403 = vsel %vm402, %v399, %v401
    %v404 = vsel %vm402, %v401, %v399
    %v406 = vlaneseq
    %v407 = vshrl.u32 %v406, 7
    %v408 = vsub.s32 0, %v407
    %v409 = vrot.slane %v70, %v408
    %v410 = vlaneseq
    %v411 = vshrl.u32 %v410, 7
    %v412 = vsub.s32 1, %v411
    %v413 = vrot.slane %v70, %v412
    %v416 = vmul.f32 %v403, %v409
    %v417 = vmul.f32 %v404, %v413
    %418 = vset.pattern.permute.xlu0 20
    %419 = vperm.xlu0 %418, %v57
    %v420 = vpop.permute.xlu0 %419
    %v422 = vmul.f32 %v416, %v420
    %v423 = vmul.f32 %v417, %v420
    %v424 = vadd.f32 %v396, %v422
    %v425 = vadd.f32 %v397, %v423
    %426 = vrot.lane.b32.xlu0 %v214, 111
    %v427 = vpop.permute.xlu0 %426
    %428 = vrot.lane.b32.xlu0 %v216, 111
    %v429 = vpop.permute.xlu0 %428
    %vm430 = vcmp.lt.s32.totalorder %v225, 111
    %v431 = vsel %vm430, %v427, %v429
    %v432 = vsel %vm430, %v429, %v427
    %v434 = vlaneseq
    %v435 = vshrl.u32 %v434, 7
    %v436 = vsub.s32 0, %v435
    %v437 = vrot.slane %v72, %v436
    %v438 = vlaneseq
    %v439 = vshrl.u32 %v438, 7
    %v440 = vsub.s32 1, %v439
    %v441 = vrot.slane %v72, %v440
    %v444 = vmul.f32 %v431, %v437
    %v445 = vmul.f32 %v432, %v441
    %446 = vset.pattern.permute.xlu0 21
    %447 = vperm.xlu0 %446, %v57
    %v448 = vpop.permute.xlu0 %447
    %v450 = vmul.f32 %v444, %v448
    %v451 = vmul.f32 %v445, %v448
    %v452 = vadd.f32 %v424, %v450
    %v453 = vadd.f32 %v425, %v451
    %454 = vset.pattern.permute.xlu0 3
    %455 = vperm.xlu0 %454, %v57
    %v456 = vpop.permute.xlu0 %455
    %v458 = vadd.f32 %v452, %v456
    %v459 = vadd.f32 %v453, %v456
    %v462 = vrot.slane %v458, 4
    %v463 = vrot.slane %v459, 4
    %v466 = vmul.f32 %v458, %v462
    %v467 = vmul.f32 %v459, %v463
    %468 = vmatprep.subr.mxu0 0.0
    %469 = vmatpush1.msra.mxu0 0.00390625
    %470 = vmatprep.subr.mxu0 0.0
    %471 = vmatpush1.msra.mxu0 0.00390625
    %472 = vmatprep.subr.mxu0 0.0
    %473 = vmatpush1.msra.mxu0 0.00390625
    %474 = vmatprep.subr.mxu0 0.0
    %475 = vmatpush1.msra.mxu0 0.00390625
    %476 = vmatprep.subr.mxu0 0.0
    %477 = vmatpush1.msra.mxu0 0.00390625
    %478 = vmatprep.subr.mxu0 0.0
    %479 = vmatpush1.msra.mxu0 0.00390625
    %480 = vmatprep.subr.mxu0 0.0
    %481 = vmatpush1.msra.mxu0 0.00390625
    %482 = vmatprep.subr.mxu0 0.0
    %483 = vmatpush1.msra.mxu0 0.00390625
    %484 = vmatprep.subr.mxu0 0.0
    %485 = vmatpush1.msra.mxu0 0.00390625
    %486 = vmatprep.subr.mxu0 0.0
    %487 = vmatpush1.msra.mxu0 0.00390625
    %488 = vmatprep.subr.mxu0 0.0
    %489 = vmatpush1.msra.mxu0 0.00390625
    %490 = vmatprep.subr.mxu0 0.0
    %491 = vmatpush1.msra.mxu0 0.00390625
    %492 = vmatprep.subr.mxu0 0.0
    %493 = vmatpush1.msra.mxu0 0.00390625
    %494 = vmatprep.subr.mxu0 0.0
    %495 = vmatpush1.msra.mxu0 0.00390625
    %496 = vmatprep.subr.mxu0 0.0
    %497 = vmatpush1.msra.mxu0 0.00390625
    %498 = vmatprep.subr.mxu0 0.0
    %499 = vmatpush1.msra.mxu0 0.00390625
    %500 = vmatprep.subr.mxu0 0.0
    %501 = vmatpush1.msra.mxu0 0.00390625
    %502 = vmatprep.subr.mxu0 0.0
    %503 = vmatpush1.msra.mxu0 0.00390625
    %504 = vmatprep.subr.mxu0 0.0
    %505 = vmatpush1.msra.mxu0 0.00390625
    %506 = vmatprep.subr.mxu0 0.0
    %507 = vmatpush1.msra.mxu0 0.00390625
    %508 = vmatprep.subr.mxu0 0.0
    %509 = vmatpush1.msra.mxu0 0.00390625
    %510 = vmatprep.subr.mxu0 0.0
    %511 = vmatpush1.msra.mxu0 0.00390625
    %512 = vmatprep.subr.mxu0 0.0
    %513 = vmatpush1.msra.mxu0 0.00390625
    %514 = vmatprep.subr.mxu0 0.0
    %515 = vmatpush1.msra.mxu0 0.00390625
    %516 = vmatprep.subr.mxu0 0.0
    %517 = vmatpush1.msra.mxu0 0.00390625
    %518 = vmatprep.subr.mxu0 0.0
    %519 = vmatpush1.msra.mxu0 0.00390625
    %520 = vmatprep.subr.mxu0 0.0
    %521 = vmatpush1.msra.mxu0 0.00390625
    %522 = vmatprep.subr.mxu0 0.0
    %523 = vmatpush1.msra.mxu0 0.00390625
    %524 = vmatprep.subr.mxu0 0.0
    %525 = vmatpush1.msra.mxu0 0.00390625
    %526 = vmatprep.subr.mxu0 0.0
    %527 = vmatpush1.msra.mxu0 0.00390625
    %528 = vmatprep.subr.mxu0 0.0
    %529 = vmatpush1.msra.mxu0 0.00390625
    %530 = vmatprep.subr.mxu0 0.0
    %531 = vmatpush1.msra.mxu0 0.00390625
    %532 = vmatprep.mubr.f32.mxu0 %v467
    %533 = vmatmul.mubr.f32.gmra.mrb[0].mxu0 %v466
    %v534 = vpop.f32.mrb[0].mxu0
    %v535 = vadd.f32 0.0, %v534
    %v536 = vpop.f32.mrb[0].mxu0
    %537 = vdwg.mxu0
    %v538 = vpack.c.bf16 %v535, %v535
    %539 = vrot.lane.b32.xlu0 %v57, 124
    %v540 = vpop.permute.xlu0 %539
    %v543 = vsel %vm168, %v77, 0
    %v546 = vsel %vm172, %v538, 0
    %548 = vmatprep.subr.bf16.mxu0 0
    %549 = vmatpush1.bf16.msra.mxu0 %v546
    %550 = vmatprep.subr.bf16.mxu0 0
    %551 = vmatpush1.bf16.msra.mxu0 0
    %552 = vmatprep.subr.bf16.mxu0 0
    %553 = vmatpush1.bf16.msra.mxu0 0
    %554 = vmatprep.subr.bf16.mxu0 0
    %555 = vmatpush1.bf16.msra.mxu0 0
    %556 = vmatprep.subr.bf16.mxu0 0
    %557 = vmatpush1.bf16.msra.mxu0 0
    %558 = vmatprep.subr.bf16.mxu0 0
    %559 = vmatpush1.bf16.msra.mxu0 0
    %560 = vmatprep.subr.bf16.mxu0 0
    %561 = vmatpush1.bf16.msra.mxu0 0
    %562 = vmatprep.subr.bf16.mxu0 0
    %563 = vmatpush1.bf16.msra.mxu0 0
    %564 = vmatprep.subr.bf16.mxu0 0
    %565 = vmatpush1.bf16.msra.mxu0 0
    %566 = vmatprep.subr.bf16.mxu0 0
    %567 = vmatpush1.bf16.msra.mxu0 0
    %568 = vmatprep.subr.bf16.mxu0 0
    %569 = vmatpush1.bf16.msra.mxu0 0
    %570 = vmatprep.subr.bf16.mxu0 0
    %571 = vmatpush1.bf16.msra.mxu0 0
    %572 = vmatprep.subr.bf16.mxu0 0
    %573 = vmatpush1.bf16.msra.mxu0 0
    %574 = vmatprep.subr.bf16.mxu0 0
    %575 = vmatpush1.bf16.msra.mxu0 0
    %576 = vmatprep.subr.bf16.mxu0 0
    %577 = vmatpush1.bf16.msra.mxu0 0
    %578 = vmatprep.subr.bf16.mxu0 0
    %579 = vmatpush1.bf16.msra.mxu0 0
    %580 = vmatprep.mubr.bf16.mxu0 0
    %581 = vmatmul.mubr.bf16.gmra.mrb[0].mxu0 %v543
    %v582 = vpop.f32.mrb[0].mxu0
    %v583 = vadd.f32 %v540, %v582
    %v584 = vpop.f32.mrb[0].mxu0
    %v585 = vpop.f32.mrb[0].mxu0
    %v586 = vpop.f32.mrb[0].mxu0
    %587 = vdwg.mxu0
    %589 = vset.pattern.permute.xlu0 0
    %590 = vperm.xlu0 %589, %v583
    %v591 = vpop.permute.xlu0 %590
    %v593 = vmul.f32 %v466, %v591
    %v594 = vmul.f32 %v467, %v591
    %v595 = vpack.c.bf16 %v593, %v593
    %v596 = vpack.c.bf16 %v594, %v594
    %597 = vset.pattern.permute.xlu0 5
    %598 = vperm.xlu0 %597, %v57
    %v599 = vpop.permute.xlu0 %598
    %v602 = vsel %vm168, %v75, 0
    %v605 = vsel %vm172, %v595, 0
    %v608 = vsel %vm172, %v596, 0
    %610 = vmatprep.subr.bf16.mxu0 %v608
    %611 = vmatpush1.bf16.msra.mxu0 %v605
    %612 = vmatprep.subr.bf16.mxu0 0
    %613 = vmatpush1.bf16.msra.mxu0 0
    %614 = vmatprep.subr.bf16.mxu0 0
    %615 = vmatpush1.bf16.msra.mxu0 0
    %616 = vmatprep.subr.bf16.mxu0 0
    %617 = vmatpush1.bf16.msra.mxu0 0
    %618 = vmatprep.subr.bf16.mxu0 0
    %619 = vmatpush1.bf16.msra.mxu0 0
    %620 = vmatprep.subr.bf16.mxu0 0
    %621 = vmatpush1.bf16.msra.mxu0 0
    %622 = vmatprep.subr.bf16.mxu0 0
    %623 = vmatpush1.bf16.msra.mxu0 0
    %624 = vmatprep.subr.bf16.mxu0 0
    %625 = vmatpush1.bf16.msra.mxu0 0
    %626 = vmatprep.subr.bf16.mxu0 0
    %627 = vmatpush1.bf16.msra.mxu0 0
    %628 = vmatprep.subr.bf16.mxu0 0
    %629 = vmatpush1.bf16.msra.mxu0 0
    %630 = vmatprep.subr.bf16.mxu0 0
    %631 = vmatpush1.bf16.msra.mxu0 0
    %632 = vmatprep.subr.bf16.mxu0 0
    %633 = vmatpush1.bf16.msra.mxu0 0
    %634 = vmatprep.subr.bf16.mxu0 0
    %635 = vmatpush1.bf16.msra.mxu0 0
    %636 = vmatprep.subr.bf16.mxu0 0
    %637 = vmatpush1.bf16.msra.mxu0 0
    %638 = vmatprep.subr.bf16.mxu0 0
    %639 = vmatpush1.bf16.msra.mxu0 0
    %640 = vmatprep.subr.bf16.mxu0 0
    %641 = vmatpush1.bf16.msra.mxu0 0
    %642 = vmatprep.mubr.bf16.mxu0 0
    %643 = vmatmul.mubr.bf16.gmra.mrb[0].mxu0 %v602
    %v644 = vpop.f32.mrb[0].mxu0
    %v645 = vadd.f32 %v599, %v644
    %v646 = vpop.f32.mrb[0].mxu0
    %v647 = vadd.f32 %v599, %v646
    %v648 = vpop.f32.mrb[0].mxu0
    %v649 = vpop.f32.mrb[0].mxu0
    %650 = vdwg.mxu0
    %651 = vset.pattern.permute.xlu0 10
    %652 = vperm.xlu0 %651, %v57
    %v653 = vpop.permute.xlu0 %652
    %v655 = vmul.f32 %v645, %v653
    %v656 = vmul.f32 %v647, %v653
    %v659 = vcombine.low %v655, %v656
    %v661 = vadd.f32 %v78, %v659
    %v663 = vcombine.high %v661, %v661
    %v665 = vsel %vm82, %v661, 0.0
    %v666 = vrot.slane %v665, 4
    %v667 = vadd.f32 %v665, %v666
    %v668 = vrot.slane %v667, 2
    %v669 = vadd.f32 %v667, %v668
    %v670 = vrot.slane %v669, 1
    %v671 = vadd.f32 %v669, %v670
    %v672 = vsel %vm82, %v663, 0.0
    %v673 = vrot.slane %v672, 4
    %v674 = vadd.f32 %v672, %v673
    %v675 = vrot.slane %v674, 2
    %v676 = vadd.f32 %v674, %v675
    %v677 = vrot.slane %v676, 1
    %v678 = vadd.f32 %v676, %v677
    %v679 = vmul.f32 %v671, %v97
    %v680 = vmul.f32 %v678, %v97
    %v683 = vcombine.low %v679, %v680
    %v685 = vsub.f32 %v661, %v683
    %v686 = vmul.f32 %v685, %v685
    %v688 = vcombine.high %v686, %v686
    %v690 = vsel %vm82, %v686, 0.0
    %v691 = vrot.slane %v690, 4
    %v692 = vadd.f32 %v690, %v691
    %v693 = vrot.slane %v692, 2
    %v694 = vadd.f32 %v692, %v693
    %v695 = vrot.slane %v694, 1
    %v696 = vadd.f32 %v694, %v695
    %v697 = vsel %vm82, %v688, 0.0
    %v698 = vrot.slane %v697, 4
    %v699 = vadd.f32 %v697, %v698
    %v700 = vrot.slane %v699, 2
    %v701 = vadd.f32 %v699, %v700
    %v702 = vrot.slane %v701, 1
    %v703 = vadd.f32 %v701, %v702
    %v704 = vmul.f32 %v696, %v97
    %v705 = vmul.f32 %v703, %v97
    %v706 = vadd.f32 %v704, 1e-06
    %v707 = vadd.f32 %v705, 1e-06
    %v708 = vrsqrt.pop %v706
    %v709 = vrsqrt.pop %v707
    %v712 = vcombine.low %v708, %v709
    %v714 = vmul.f32 %v685, %v712
    %715 = vset.pattern.permute.xlu0 6
    %716 = vperm.xlu0 %715, %v57
    %v717 = vpop.permute.xlu0 %716
    %v719 = vunpack.c.l.s4 839922192
    %v720 = vunpack.c.0.s8 %v719
    %v721 = vlaneseq
    %v722 = vshrl.u32 %v721, 7
    %v723 = vsub.s32 %v720, %v722
    %v724 = vrot.slane %v717, %v723
    %v726 = vmul.f32 %v714, %v724
    %727 = vset.pattern.permute.xlu0 7
    %728 = vperm.xlu0 %727, %v57
    %v729 = vpop.permute.xlu0 %728
    %v731 = vunpack.c.l.s4 839922192
    %v732 = vunpack.c.0.s8 %v731
    %v733 = vlaneseq
    %v734 = vshrl.u32 %v733, 7
    %v735 = vsub.s32 %v732, %v734
    %v736 = vrot.slane %v729, %v735
    %v738 = vadd.f32 %v726, %v736
    %v740 = vcombine.high %v738, %v738
    %v742 = vpack.c.bf16 %v738, %v738
    %v743 = vpack.c.bf16 %v740, %v740
    %744 = vset.pattern.permute.xlu0 8
    %745 = vperm.xlu0 %744, %v57
    %v746 = vpop.permute.xlu0 %745
    %v749 = vsel %vm168, %v74, 0
    %v752 = vsel %vm172, %v742, 0
    %v755 = vsel %vm172, %v743, 0
    %757 = vmatprep.subr.bf16.mxu0 %v755
    %758 = vmatpush1.bf16.msra.mxu0 %v752
    %759 = vmatprep.subr.bf16.mxu0 0
    %760 = vmatpush1.bf16.msra.mxu0 0
    %761 = vmatprep.subr.bf16.mxu0 0
    %762 = vmatpush1.bf16.msra.mxu0 0
    %763 = vmatprep.subr.bf16.mxu0 0
    %764 = vmatpush1.bf16.msra.mxu0 0
    %765 = vmatprep.subr.bf16.mxu0 0
    %766 = vmatpush1.bf16.msra.mxu0 0
    %767 = vmatprep.subr.bf16.mxu0 0
    %768 = vmatpush1.bf16.msra.mxu0 0
    %769 = vmatprep.subr.bf16.mxu0 0
    %770 = vmatpush1.bf16.msra.mxu0 0
    %771 = vmatprep.subr.bf16.mxu0 0
    %772 = vmatpush1.bf16.msra.mxu0 0
    %773 = vmatprep.subr.bf16.mxu0 0
    %774 = vmatpush1.bf16.msra.mxu0 0
    %775 = vmatprep.subr.bf16.mxu0 0
    %776 = vmatpush1.bf16.msra.mxu0 0
    %777 = vmatprep.subr.bf16.mxu0 0
    %778 = vmatpush1.bf16.msra.mxu0 0
    %779 = vmatprep.subr.bf16.mxu0 0
    %780 = vmatpush1.bf16.msra.mxu0 0
    %781 = vmatprep.subr.bf16.mxu0 0
    %782 = vmatpush1.bf16.msra.mxu0 0
    %783 = vmatprep.subr.bf16.mxu0 0
    %784 = vmatpush1.bf16.msra.mxu0 0
    %785 = vmatprep.subr.bf16.mxu0 0
    %786 = vmatpush1.bf16.msra.mxu0 0
    %787 = vmatprep.subr.bf16.mxu0 0
    %788 = vmatpush1.bf16.msra.mxu0 0
    %789 = vmatprep.mubr.bf16.mxu0 0
    %790 = vmatmul.mubr.bf16.gmra.mrb[0].mxu0 %v749
    %v791 = vpop.f32.mrb[0].mxu0
    %v792 = vadd.f32 %v746, %v791
    %v793 = vpop.f32.mrb[0].mxu0
    %v794 = vadd.f32 %v746, %v793
    %v795 = vpop.f32.mrb[0].mxu0
    %v796 = vpop.f32.mrb[0].mxu0
    %797 = vdwg.mxu0
    %v800 = vrot.slane %v792, 4
    %v801 = vrot.slane %v794, 4
    %v804 = vmul.f32 %v792, %v800
    %v805 = vmul.f32 %v794, %v801
    %806 = vset.pattern.permute.xlu0 12
    %807 = vperm.xlu0 %806, %v57
    %v808 = vpop.permute.xlu0 %807
    %v810 = vmul.f32 %v804, %v808
    %v811 = vmul.f32 %v805, %v808
    %v812 = vsel %vm82, %v810, 0.0
    %v813 = vrot.slane %v812, 4
    %v814 = vadd.f32 %v812, %v813
    %v815 = vrot.slane %v814, 2
    %v816 = vadd.f32 %v814, %v815
    %v817 = vrot.slane %v816, 1
    %v818 = vadd.f32 %v816, %v817
    %v819 = vsel %vm82, %v811, 0.0
    %v820 = vrot.slane %v819, 4
    %v821 = vadd.f32 %v819, %v820
    %v822 = vrot.slane %v821, 2
    %v823 = vadd.f32 %v821, %v822
    %v824 = vrot.slane %v823, 1
    %v825 = vadd.f32 %v823, %v824
    %v826 = vmul.f32 %v804, %v804
    %v827 = vmul.f32 %v805, %v805
    %v828 = vsel %vm82, %v826, 0.0
    %v829 = vrot.slane %v828, 4
    %v830 = vadd.f32 %v828, %v829
    %v831 = vrot.slane %v830, 2
    %v832 = vadd.f32 %v830, %v831
    %v833 = vrot.slane %v832, 1
    %v834 = vadd.f32 %v832, %v833
    %v835 = vsel %vm82, %v827, 0.0
    %v836 = vrot.slane %v835, 4
    %v837 = vadd.f32 %v835, %v836
    %v838 = vrot.slane %v837, 2
    %v839 = vadd.f32 %v837, %v838
    %v840 = vrot.slane %v839, 1
    %v841 = vadd.f32 %v839, %v840
    %v842 = vmax.f32 %v834, 1e-12
    %v843 = vmax.f32 %v841, 1e-12
    %v844 = vrsqrt.pop %v842
    %v845 = vrsqrt.pop %v843
    %v846 = vmul.f32 %v818, %v844
    %v847 = vmul.f32 %v825, %v845
    %v848 = vmul.f32 %v804, %v846
    %v849 = vmul.f32 %v805, %v847
    %v850 = vpack.c.bf16 %v848, %v848
    %v851 = vpack.c.bf16 %v849, %v849
    %852 = vset.pattern.permute.xlu0 9
    %853 = vperm.xlu0 %852, %v57
    %v854 = vpop.permute.xlu0 %853
    %v857 = vsel %vm168, %v76, 0
    %v860 = vsel %vm172, %v850, 0
    %v863 = vsel %vm172, %v851, 0
    %865 = vmatprep.subr.bf16.mxu0 %v863
    %866 = vmatpush1.bf16.msra.mxu0 %v860
    %867 = vmatprep.subr.bf16.mxu0 0
    %868 = vmatpush1.bf16.msra.mxu0 0
    %869 = vmatprep.subr.bf16.mxu0 0
    %870 = vmatpush1.bf16.msra.mxu0 0
    %871 = vmatprep.subr.bf16.mxu0 0
    %872 = vmatpush1.bf16.msra.mxu0 0
    %873 = vmatprep.subr.bf16.mxu0 0
    %874 = vmatpush1.bf16.msra.mxu0 0
    %875 = vmatprep.subr.bf16.mxu0 0
    %876 = vmatpush1.bf16.msra.mxu0 0
    %877 = vmatprep.subr.bf16.mxu0 0
    %878 = vmatpush1.bf16.msra.mxu0 0
    %879 = vmatprep.subr.bf16.mxu0 0
    %880 = vmatpush1.bf16.msra.mxu0 0
    %881 = vmatprep.subr.bf16.mxu0 0
    %882 = vmatpush1.bf16.msra.mxu0 0
    %883 = vmatprep.subr.bf16.mxu0 0
    %884 = vmatpush1.bf16.msra.mxu0 0
    %885 = vmatprep.subr.bf16.mxu0 0
    %886 = vmatpush1.bf16.msra.mxu0 0
    %887 = vmatprep.subr.bf16.mxu0 0
    %888 = vmatpush1.bf16.msra.mxu0 0
    %889 = vmatprep.subr.bf16.mxu0 0
    %890 = vmatpush1.bf16.msra.mxu0 0
    %891 = vmatprep.subr.bf16.mxu0 0
    %892 = vmatpush1.bf16.msra.mxu0 0
    %893 = vmatprep.subr.bf16.mxu0 0
    %894 = vmatpush1.bf16.msra.mxu0 0
    %895 = vmatprep.subr.bf16.mxu0 0
    %896 = vmatpush1.bf16.msra.mxu0 0
    %897 = vmatprep.mubr.bf16.mxu0 0
    %898 = vmatmul.mubr.bf16.gmra.mrb[0].mxu0 %v857
    %v899 = vpop.f32.mrb[0].mxu0
    %v900 = vadd.f32 %v854, %v899
    %v901 = vpop.f32.mrb[0].mxu0
    %v902 = vadd.f32 %v854, %v901
    %v903 = vpop.f32.mrb[0].mxu0
    %v904 = vpop.f32.mrb[0].mxu0
    %905 = vdwg.mxu0
    %906 = vset.pattern.permute.xlu0 11
    %907 = vperm.xlu0 %906, %v57
    %v908 = vpop.permute.xlu0 %907
    %v910 = vmul.f32 %v900, %v908
    %v911 = vmul.f32 %v902, %v908
    %v914 = vcombine.low %v910, %v911
    %v916 = vadd.f32 %v661, %v914
    %917 = vst [vmem:[#allocation7] sm:$0xff] %v916
    %s918 = scalar_lea.vmem [#allocation2], 8
    %v919 = vld [vmem:[%s918] sm:$0xff]
    %v921 = vcombine.high %v919, %v919
    %v923 = vsel %vm82, %v919, 0.0
    %v924 = vrot.slane %v923, 4
    %v925 = vadd.f32 %v923, %v924
    %v926 = vrot.slane %v925, 2
    %v927 = vadd.f32 %v925, %v926
    %v928 = vrot.slane %v927, 1
    %v929 = vadd.f32 %v927, %v928
    %v930 = vsel %vm82, %v921, 0.0
    %v931 = vrot.slane %v930, 4
    %v932 = vadd.f32 %v930, %v931
    %v933 = vrot.slane %v932, 2
    %v934 = vadd.f32 %v932, %v933
    %v935 = vrot.slane %v934, 1
    %v936 = vadd.f32 %v934, %v935
    %v937 = vmul.f32 %v929, %v97
    %v938 = vmul.f32 %v936, %v97
    %v941 = vcombine.low %v937, %v938
    %v943 = vsub.f32 %v919, %v941
    %v944 = vmul.f32 %v943, %v943
    %v946 = vcombine.high %v944, %v944
    %v948 = vsel %vm82, %v944, 0.0
    %v949 = vrot.slane %v948, 4
    %v950 = vadd.f32 %v948, %v949
    %v951 = vrot.slane %v950, 2
    %v952 = vadd.f32 %v950, %v951
    %v953 = vrot.slane %v952, 1
    %v954 = vadd.f32 %v952, %v953
    %v955 = vsel %vm82, %v946, 0.0
    %v956 = vrot.slane %v955, 4
    %v957 = vadd.f32 %v955, %v956
    %v958 = vrot.slane %v957, 2
    %v959 = vadd.f32 %v957, %v958
    %v960 = vrot.slane %v959, 1
    %v961 = vadd.f32 %v959, %v960
    %v962 = vmul.f32 %v954, %v97
    %v963 = vmul.f32 %v961, %v97
    %v964 = vadd.f32 %v962, 1e-06
    %v965 = vadd.f32 %v963, 1e-06
    %v966 = vrsqrt.pop %v964
    %v967 = vrsqrt.pop %v965
    %v970 = vcombine.low %v966, %v967
    %v972 = vmul.f32 %v943, %v970
    %v973 = vmul.f32 %v972, %v144
    %v974 = vadd.f32 %v973, %v156
    %v976 = vcombine.high %v974, %v974
    %v978 = vpack.c.bf16 %v974, %v974
    %v979 = vpack.c.bf16 %v976, %v976
    %v981 = vsel %vm172, %v978, 0
    %v984 = vsel %vm172, %v979, 0
    %986 = vmatprep.subr.bf16.mxu0 %v984
    %987 = vmatpush1.bf16.msra.mxu0 %v981
    %988 = vmatprep.subr.bf16.mxu0 0
    %989 = vmatpush1.bf16.msra.mxu0 0
    %990 = vmatprep.subr.bf16.mxu0 0
    %991 = vmatpush1.bf16.msra.mxu0 0
    %992 = vmatprep.subr.bf16.mxu0 0
    %993 = vmatpush1.bf16.msra.mxu0 0
    %994 = vmatprep.subr.bf16.mxu0 0
    %995 = vmatpush1.bf16.msra.mxu0 0
    %996 = vmatprep.subr.bf16.mxu0 0
    %997 = vmatpush1.bf16.msra.mxu0 0
    %998 = vmatprep.subr.bf16.mxu0 0
    %999 = vmatpush1.bf16.msra.mxu0 0
    %1000 = vmatprep.subr.bf16.mxu0 0
    %1001 = vmatpush1.bf16.msra.mxu0 0
    %1002 = vmatprep.subr.bf16.mxu0 0
    %1003 = vmatpush1.bf16.msra.mxu0 0
    %1004 = vmatprep.subr.bf16.mxu0 0
    %1005 = vmatpush1.bf16.msra.mxu0 0
    %1006 = vmatprep.subr.bf16.mxu0 0
    %1007 = vmatpush1.bf16.msra.mxu0 0
    %1008 = vmatprep.subr.bf16.mxu0 0
    %1009 = vmatpush1.bf16.msra.mxu0 0
    %1010 = vmatprep.subr.bf16.mxu0 0
    %1011 = vmatpush1.bf16.msra.mxu0 0
    %1012 = vmatprep.subr.bf16.mxu0 0
    %1013 = vmatpush1.bf16.msra.mxu0 0
    %1014 = vmatprep.subr.bf16.mxu0 0
    %1015 = vmatpush1.bf16.msra.mxu0 0
    %1016 = vmatprep.subr.bf16.mxu0 0
    %1017 = vmatpush1.bf16.msra.mxu0 0
    %1018 = vmatprep.mubr.bf16.mxu0 0
    %1019 = vmatmul.mubr.bf16.gmra.mrb[0].mxu0 %v170
    %v1020 = vpop.f32.mrb[0].mxu0
    %v1021 = vadd.f32 %v166, %v1020
    %v1022 = vpop.f32.mrb[0].mxu0
    %v1023 = vadd.f32 %v166, %v1022
    %v1024 = vpop.f32.mrb[0].mxu0
    %v1025 = vpop.f32.mrb[0].mxu0
    %1026 = vdwg.mxu0
    %1027 = vrot.lane.b32.xlu0 %v1021, 17
    %v1028 = vpop.permute.xlu0 %1027
    %1029 = vrot.lane.b32.xlu0 %v1023, 17
    %v1030 = vpop.permute.xlu0 %1029
    %v1031 = vsel %vm226, %v1028, %v1030
    %v1032 = vsel %vm226, %v1030, %v1028
    %v1033 = vmul.f32 %v1032, %v233
    %v1034 = vmul.f32 %v1031, %v237
    %v1035 = vmul.f32 %v1033, %v244
    %v1036 = vmul.f32 %v1034, %v244
    %v1037 = vadd.f32 %v1035, 0.0
    %v1038 = vadd.f32 %v1036, 0.0
    %1039 = vrot.lane.b32.xlu0 %v1021, 16
    %v1040 = vpop.permute.xlu0 %1039
    %1041 = vrot.lane.b32.xlu0 %v1023, 16
    %v1042 = vpop.permute.xlu0 %1041
    %v1043 = vsel %vm254, %v1040, %v1042
    %v1044 = vsel %vm254, %v1042, %v1040
    %v1045 = vmul.f32 %v1044, %v261
    %v1046 = vmul.f32 %v1043, %v265
    %v1047 = vmul.f32 %v1045, %v272
    %v1048 = vmul.f32 %v1046, %v272
    %v1049 = vadd.f32 %v1037, %v1047
    %v1050 = vadd.f32 %v1038, %v1048
    %1051 = vrot.lane.b32.xlu0 %v1021, 15
    %v1052 = vpop.permute.xlu0 %1051
    %1053 = vrot.lane.b32.xlu0 %v1023, 15
    %v1054 = vpop.permute.xlu0 %1053
    %v1055 = vsel %vm282, %v1052, %v1054
    %v1056 = vsel %vm282, %v1054, %v1052
    %v1057 = vmul.f32 %v1056, %v289
    %v1058 = vmul.f32 %v1055, %v293
    %v1059 = vmul.f32 %v1057, %v300
    %v1060 = vmul.f32 %v1058, %v300
    %v1061 = vadd.f32 %v1049, %v1059
    %v1062 = vadd.f32 %v1050, %v1060
    %1063 = vrot.lane.b32.xlu0 %v1021, 1
    %v1064 = vpop.permute.xlu0 %1063
    %1065 = vrot.lane.b32.xlu0 %v1023, 1
    %v1066 = vpop.permute.xlu0 %1065
    %v1067 = vsel %vm310, %v1064, %v1066
    %v1068 = vsel %vm310, %v1066, %v1064
    %v1069 = vmul.f32 %v1068, %v317
    %v1070 = vmul.f32 %v1067, %v321
    %v1071 = vmul.f32 %v1069, %v328
    %v1072 = vmul.f32 %v1070, %v328
    %v1073 = vadd.f32 %v1061, %v1071
    %v1074 = vadd.f32 %v1062, %v1072
    %v1075 = vmul.f32 %v1021, %v336
    %v1076 = vmul.f32 %v1023, %v336
    %v1077 = vadd.f32 %v1073, %v1075
    %v1078 = vadd.f32 %v1074, %v1076
    %1079 = vrot.lane.b32.xlu0 %v1021, 127
    %v1080 = vpop.permute.xlu0 %1079
    %1081 = vrot.lane.b32.xlu0 %v1023, 127
    %v1082 = vpop.permute.xlu0 %1081
    %v1083 = vsel %vm346, %v1080, %v1082
    %v1084 = vsel %vm346, %v1082, %v1080
    %v1085 = vmul.f32 %v1083, %v353
    %v1086 = vmul.f32 %v1084, %v357
    %v1087 = vmul.f32 %v1085, %v364
    %v1088 = vmul.f32 %v1086, %v364
    %v1089 = vadd.f32 %v1077, %v1087
    %v1090 = vadd.f32 %v1078, %v1088
    %1091 = vrot.lane.b32.xlu0 %v1021, 113
    %v1092 = vpop.permute.xlu0 %1091
    %1093 = vrot.lane.b32.xlu0 %v1023, 113
    %v1094 = vpop.permute.xlu0 %1093
    %v1095 = vsel %vm374, %v1092, %v1094
    %v1096 = vsel %vm374, %v1094, %v1092
    %v1097 = vmul.f32 %v1095, %v381
    %v1098 = vmul.f32 %v1096, %v385
    %v1099 = vmul.f32 %v1097, %v392
    %v1100 = vmul.f32 %v1098, %v392
    %v1101 = vadd.f32 %v1089, %v1099
    %v1102 = vadd.f32 %v1090, %v1100
    %1103 = vrot.lane.b32.xlu0 %v1021, 112
    %v1104 = vpop.permute.xlu0 %1103
    %1105 = vrot.lane.b32.xlu0 %v1023, 112
    %v1106 = vpop.permute.xlu0 %1105
    %v1107 = vsel %vm402, %v1104, %v1106
    %v1108 = vsel %vm402, %v1106, %v1104
    %v1109 = vmul.f32 %v1107, %v409
    %v1110 = vmul.f32 %v1108, %v413
    %v1111 = vmul.f32 %v1109, %v420
    %v1112 = vmul.f32 %v1110, %v420
    %v1113 = vadd.f32 %v1101, %v1111
    %v1114 = vadd.f32 %v1102, %v1112
    %1115 = vrot.lane.b32.xlu0 %v1021, 111
    %v1116 = vpop.permute.xlu0 %1115
    %1117 = vrot.lane.b32.xlu0 %v1023, 111
    %v1118 = vpop.permute.xlu0 %1117
    %v1119 = vsel %vm430, %v1116, %v1118
    %v1120 = vsel %vm430, %v1118, %v1116
    %v1121 = vmul.f32 %v1119, %v437
    %v1122 = vmul.f32 %v1120, %v441
    %v1123 = vmul.f32 %v1121, %v448
    %v1124 = vmul.f32 %v1122, %v448
    %v1125 = vadd.f32 %v1113, %v1123
    %v1126 = vadd.f32 %v1114, %v1124
    %v1127 = vadd.f32 %v1125, %v456
    %v1128 = vadd.f32 %v1126, %v456
    %v1131 = vrot.slane %v1127, 4
    %v1132 = vrot.slane %v1128, 4
    %v1135 = vmul.f32 %v1127, %v1131
    %v1136 = vmul.f32 %v1128, %v1132
    %1137 = vmatprep.subr.mxu0 0.0
    %1138 = vmatpush1.msra.mxu0 0.00390625
    %1139 = vmatprep.subr.mxu0 0.0
    %1140 = vmatpush1.msra.mxu0 0.00390625
    %1141 = vmatprep.subr.mxu0 0.0
    %1142 = vmatpush1.msra.mxu0 0.00390625
    %1143 = vmatprep.subr.mxu0 0.0
    %1144 = vmatpush1.msra.mxu0 0.00390625
    %1145 = vmatprep.subr.mxu0 0.0
    %1146 = vmatpush1.msra.mxu0 0.00390625
    %1147 = vmatprep.subr.mxu0 0.0
    %1148 = vmatpush1.msra.mxu0 0.00390625
    %1149 = vmatprep.subr.mxu0 0.0
    %1150 = vmatpush1.msra.mxu0 0.00390625
    %1151 = vmatprep.subr.mxu0 0.0
    %1152 = vmatpush1.msra.mxu0 0.00390625
    %1153 = vmatprep.subr.mxu0 0.0
    %1154 = vmatpush1.msra.mxu0 0.00390625
    %1155 = vmatprep.subr.mxu0 0.0
    %1156 = vmatpush1.msra.mxu0 0.00390625
    %1157 = vmatprep.subr.mxu0 0.0
    %1158 = vmatpush1.msra.mxu0 0.00390625
    %1159 = vmatprep.subr.mxu0 0.0
    %1160 = vmatpush1.msra.mxu0 0.00390625
    %1161 = vmatprep.subr.mxu0 0.0
    %1162 = vmatpush1.msra.mxu0 0.00390625
    %1163 = vmatprep.subr.mxu0 0.0
    %1164 = vmatpush1.msra.mxu0 0.00390625
    %1165 = vmatprep.subr.mxu0 0.0
    %1166 = vmatpush1.msra.mxu0 0.00390625
    %1167 = vmatprep.subr.mxu0 0.0
    %1168 = vmatpush1.msra.mxu0 0.00390625
    %1169 = vmatprep.subr.mxu0 0.0
    %1170 = vmatpush1.msra.mxu0 0.00390625
    %1171 = vmatprep.subr.mxu0 0.0
    %1172 = vmatpush1.msra.mxu0 0.00390625
    %1173 = vmatprep.subr.mxu0 0.0
    %1174 = vmatpush1.msra.mxu0 0.00390625
    %1175 = vmatprep.subr.mxu0 0.0
    %1176 = vmatpush1.msra.mxu0 0.00390625
    %1177 = vmatprep.subr.mxu0 0.0
    %1178 = vmatpush1.msra.mxu0 0.00390625
    %1179 = vmatprep.subr.mxu0 0.0
    %1180 = vmatpush1.msra.mxu0 0.00390625
    %1181 = vmatprep.subr.mxu0 0.0
    %1182 = vmatpush1.msra.mxu0 0.00390625
    %1183 = vmatprep.subr.mxu0 0.0
    %1184 = vmatpush1.msra.mxu0 0.00390625
    %1185 = vmatprep.subr.mxu0 0.0
    %1186 = vmatpush1.msra.mxu0 0.00390625
    %1187 = vmatprep.subr.mxu0 0.0
    %1188 = vmatpush1.msra.mxu0 0.00390625
    %1189 = vmatprep.subr.mxu0 0.0
    %1190 = vmatpush1.msra.mxu0 0.00390625
    %1191 = vmatprep.subr.mxu0 0.0
    %1192 = vmatpush1.msra.mxu0 0.00390625
    %1193 = vmatprep.subr.mxu0 0.0
    %1194 = vmatpush1.msra.mxu0 0.00390625
    %1195 = vmatprep.subr.mxu0 0.0
    %1196 = vmatpush1.msra.mxu0 0.00390625
    %1197 = vmatprep.subr.mxu0 0.0
    %1198 = vmatpush1.msra.mxu0 0.00390625
    %1199 = vmatprep.subr.mxu0 0.0
    %1200 = vmatpush1.msra.mxu0 0.00390625
    %1201 = vmatprep.mubr.f32.mxu0 %v1136
    %1202 = vmatmul.mubr.f32.gmra.mrb[0].mxu0 %v1135
    %v1203 = vpop.f32.mrb[0].mxu0
    %v1204 = vadd.f32 0.0, %v1203
    %v1205 = vpop.f32.mrb[0].mxu0
    %1206 = vdwg.mxu0
    %v1207 = vpack.c.bf16 %v1204, %v1204
    %v1209 = vsel %vm172, %v1207, 0
    %1211 = vmatprep.subr.bf16.mxu0 0
    %1212 = vmatpush1.bf16.msra.mxu0 %v1209
    %1213 = vmatprep.subr.bf16.mxu0 0
    %1214 = vmatpush1.bf16.msra.mxu0 0
    %1215 = vmatprep.subr.bf16.mxu0 0
    %1216 = vmatpush1.bf16.msra.mxu0 0
    %1217 = vmatprep.subr.bf16.mxu0 0
    %1218 = vmatpush1.bf16.msra.mxu0 0
    %1219 = vmatprep.subr.bf16.mxu0 0
    %1220 = vmatpush1.bf16.msra.mxu0 0
    %1221 = vmatprep.subr.bf16.mxu0 0
    %1222 = vmatpush1.bf16.msra.mxu0 0
    %1223 = vmatprep.subr.bf16.mxu0 0
    %1224 = vmatpush1.bf16.msra.mxu0 0
    %1225 = vmatprep.subr.bf16.mxu0 0
    %1226 = vmatpush1.bf16.msra.mxu0 0
    %1227 = vmatprep.subr.bf16.mxu0 0
    %1228 = vmatpush1.bf16.msra.mxu0 0
    %1229 = vmatprep.subr.bf16.mxu0 0
    %1230 = vmatpush1.bf16.msra.mxu0 0
    %1231 = vmatprep.subr.bf16.mxu0 0
    %1232 = vmatpush1.bf16.msra.mxu0 0
    %1233 = vmatprep.subr.bf16.mxu0 0
    %1234 = vmatpush1.bf16.msra.mxu0 0
    %1235 = vmatprep.subr.bf16.mxu0 0
    %1236 = vmatpush1.bf16.msra.mxu0 0
    %1237 = vmatprep.subr.bf16.mxu0 0
    %1238 = vmatpush1.bf16.msra.mxu0 0
    %1239 = vmatprep.subr.bf16.mxu0 0
    %1240 = vmatpush1.bf16.msra.mxu0 0
    %1241 = vmatprep.subr.bf16.mxu0 0
    %1242 = vmatpush1.bf16.msra.mxu0 0
    %1243 = vmatprep.mubr.bf16.mxu0 0
    %1244 = vmatmul.mubr.bf16.gmra.mrb[0].mxu0 %v543
    %v1245 = vpop.f32.mrb[0].mxu0
    %v1246 = vadd.f32 %v540, %v1245
    %v1247 = vpop.f32.mrb[0].mxu0
    %v1248 = vpop.f32.mrb[0].mxu0
    %v1249 = vpop.f32.mrb[0].mxu0
    %1250 = vdwg.mxu0
    %1252 = vset.pattern.permute.xlu0 0
    %1253 = vperm.xlu0 %1252, %v1246
    %v1254 = vpop.permute.xlu0 %1253
    %v1256 = vmul.f32 %v1135, %v1254
    %v1257 = vmul.f32 %v1136, %v1254
    %v1258 = vpack.c.bf16 %v1256, %v1256
    %v1259 = vpack.c.bf16 %v1257, %v1257
    %v1261 = vsel %vm172, %v1258, 0
    %v1264 = vsel %vm172, %v1259, 0
    %1266 = vmatprep.subr.bf16.mxu0 %v1264
    %1267 = vmatpush1.bf16.msra.mxu0 %v1261
    %1268 = vmatprep.subr.bf16.mxu0 0
    %1269 = vmatpush1.bf16.msra.mxu0 0
    %1270 = vmatprep.subr.bf16.mxu0 0
    %1271 = vmatpush1.bf16.msra.mxu0 0
    %1272 = vmatprep.subr.bf16.mxu0 0
    %1273 = vmatpush1.bf16.msra.mxu0 0
    %1274 = vmatprep.subr.bf16.mxu0 0
    %1275 = vmatpush1.bf16.msra.mxu0 0
    %1276 = vmatprep.subr.bf16.mxu0 0
    %1277 = vmatpush1.bf16.msra.mxu0 0
    %1278 = vmatprep.subr.bf16.mxu0 0
    %1279 = vmatpush1.bf16.msra.mxu0 0
    %1280 = vmatprep.subr.bf16.mxu0 0
    %1281 = vmatpush1.bf16.msra.mxu0 0
    %1282 = vmatprep.subr.bf16.mxu0 0
    %1283 = vmatpush1.bf16.msra.mxu0 0
    %1284 = vmatprep.subr.bf16.mxu0 0
    %1285 = vmatpush1.bf16.msra.mxu0 0
    %1286 = vmatprep.subr.bf16.mxu0 0
    %1287 = vmatpush1.bf16.msra.mxu0 0
    %1288 = vmatprep.subr.bf16.mxu0 0
    %1289 = vmatpush1.bf16.msra.mxu0 0
    %1290 = vmatprep.subr.bf16.mxu0 0
    %1291 = vmatpush1.bf16.msra.mxu0 0
    %1292 = vmatprep.subr.bf16.mxu0 0
    %1293 = vmatpush1.bf16.msra.mxu0 0
    %1294 = vmatprep.subr.bf16.mxu0 0
    %1295 = vmatpush1.bf16.msra.mxu0 0
    %1296 = vmatprep.subr.bf16.mxu0 0
    %1297 = vmatpush1.bf16.msra.mxu0 0
    %1298 = vmatprep.mubr.bf16.mxu0 0
    %1299 = vmatmul.mubr.bf16.gmra.mrb[0].mxu0 %v602
    %v1300 = vpop.f32.mrb[0].mxu0
    %v1301 = vadd.f32 %v599, %v1300
    %v1302 = vpop.f32.mrb[0].mxu0
    %v1303 = vadd.f32 %v599, %v1302
    %v1304 = vpop.f32.mrb[0].mxu0
    %v1305 = vpop.f32.mrb[0].mxu0
    %1306 = vdwg.mxu0
    %v1307 = vmul.f32 %v1301, %v653
    %v1308 = vmul.f32 %v1303, %v653
    %v1311 = vcombine.low %v1307, %v1308
    %v1313 = vadd.f32 %v919, %v1311
    %v1315 = vcombine.high %v1313, %v1313
    %v1317 = vsel %vm82, %v1313, 0.0
    %v1318 = vrot.slane %v1317, 4
    %v1319 = vadd.f32 %v1317, %v1318
    %v1320 = vrot.slane %v1319, 2
    %v1321 = vadd.f32 %v1319, %v1320
    %v1322 = vrot.slane %v1321, 1
    %v1323 = vadd.f32 %v1321, %v1322
    %v1324 = vsel %vm82, %v1315, 0.0
    %v1325 = vrot.slane %v1324, 4
    %v1326 = vadd.f32 %v1324, %v1325
    %v1327 = vrot.slane %v1326, 2
    %v1328 = vadd.f32 %v1326, %v1327
    %v1329 = vrot.slane %v1328, 1
    %v1330 = vadd.f32 %v1328, %v1329
    %v1331 = vmul.f32 %v1323, %v97
    %v1332 = vmul.f32 %v1330, %v97
    %v1335 = vcombine.low %v1331, %v1332
    %v1337 = vsub.f32 %v1313, %v1335
    %v1338 = vmul.f32 %v1337, %v1337
    %v1340 = vcombine.high %v1338, %v1338
    %v1342 = vsel %vm82, %v1338, 0.0
    %v1343 = vrot.slane %v1342, 4
    %v1344 = vadd.f32 %v1342, %v1343
    %v1345 = vrot.slane %v1344, 2
    %v1346 = vadd.f32 %v1344, %v1345
    %v1347 = vrot.slane %v1346, 1
    %v1348 = vadd.f32 %v1346, %v1347
    %v1349 = vsel %vm82, %v1340, 0.0
    %v1350 = vrot.slane %v1349, 4
    %v1351 = vadd.f32 %v1349, %v1350
    %v1352 = vrot.slane %v1351, 2
    %v1353 = vadd.f32 %v1351, %v1352
    %v1354 = vrot.slane %v1353, 1
    %v1355 = vadd.f32 %v1353, %v1354
    %v1356 = vmul.f32 %v1348, %v97
    %v1357 = vmul.f32 %v1355, %v97
    %v1358 = vadd.f32 %v1356, 1e-06
    %v1359 = vadd.f32 %v1357, 1e-06
    %v1360 = vrsqrt.pop %v1358
    %v1361 = vrsqrt.pop %v1359
    %v1364 = vcombine.low %v1360, %v1361
    %v1366 = vmul.f32 %v1337, %v1364
    %v1367 = vmul.f32 %v1366, %v724
    %v1368 = vadd.f32 %v1367, %v736
    %v1370 = vcombine.high %v1368, %v1368
    %v1372 = vpack.c.bf16 %v1368, %v1368
    %v1373 = vpack.c.bf16 %v1370, %v1370
    %v1375 = vsel %vm172, %v1372, 0
    %v1378 = vsel %vm172, %v1373, 0
    %1380 = vmatprep.subr.bf16.mxu0 %v1378
    %1381 = vmatpush1.bf16.msra.mxu0 %v1375
    %1382 = vmatprep.subr.bf16.mxu0 0
    %1383 = vmatpush1.bf16.msra.mxu0 0
    %1384 = vmatprep.subr.bf16.mxu0 0
    %1385 = vmatpush1.bf16.msra.mxu0 0
    %1386 = vmatprep.subr.bf16.mxu0 0
    %1387 = vmatpush1.bf16.msra.mxu0 0
    %1388 = vmatprep.subr.bf16.mxu0 0
    %1389 = vmatpush1.bf16.msra.mxu0 0
    %1390 = vmatprep.subr.bf16.mxu0 0
    %1391 = vmatpush1.bf16.msra.mxu0 0
    %1392 = vmatprep.subr.bf16.mxu0 0
    %1393 = vmatpush1.bf16.msra.mxu0 0
    %1394 = vmatprep.subr.bf16.mxu0 0
    %1395 = vmatpush1.bf16.msra.mxu0 0
    %1396 = vmatprep.subr.bf16.mxu0 0
    %1397 = vmatpush1.bf16.msra.mxu0 0
    %1398 = vmatprep.subr.bf16.mxu0 0
    %1399 = vmatpush1.bf16.msra.mxu0 0
    %1400 = vmatprep.subr.bf16.mxu0 0
    %1401 = vmatpush1.bf16.msra.mxu0 0
    %1402 = vmatprep.subr.bf16.mxu0 0
    %1403 = vmatpush1.bf16.msra.mxu0 0
    %1404 = vmatprep.subr.bf16.mxu0 0
    %1405 = vmatpush1.bf16.msra.mxu0 0
    %1406 = vmatprep.subr.bf16.mxu0 0
    %1407 = vmatpush1.bf16.msra.mxu0 0
    %1408 = vmatprep.subr.bf16.mxu0 0
    %1409 = vmatpush1.bf16.msra.mxu0 0
    %1410 = vmatprep.subr.bf16.mxu0 0
    %1411 = vmatpush1.bf16.msra.mxu0 0
    %1412 = vmatprep.mubr.bf16.mxu0 0
    %1413 = vmatmul.mubr.bf16.gmra.mrb[0].mxu0 %v749
    %v1414 = vpop.f32.mrb[0].mxu0
    %v1415 = vadd.f32 %v746, %v1414
    %v1416 = vpop.f32.mrb[0].mxu0
    %v1417 = vadd.f32 %v746, %v1416
    %v1418 = vpop.f32.mrb[0].mxu0
    %v1419 = vpop.f32.mrb[0].mxu0
    %1420 = vdwg.mxu0
    %v1423 = vrot.slane %v1415, 4
    %v1424 = vrot.slane %v1417, 4
    %v1427 = vmul.f32 %v1415, %v1423
    %v1428 = vmul.f32 %v1417, %v1424
    %v1429 = vmul.f32 %v1427, %v808
    %v1430 = vmul.f32 %v1428, %v808
    %v1431 = vsel %vm82, %v1429, 0.0
    %v1432 = vrot.slane %v1431, 4
    %v1433 = vadd.f32 %v1431, %v1432
    %v1434 = vrot.slane %v1433, 2
    %v1435 = vadd.f32 %v1433, %v1434
    %v1436 = vrot.slane %v1435, 1
    %v1437 = vadd.f32 %v1435, %v1436
    %v1438 = vsel %vm82, %v1430, 0.0
    %v1439 = vrot.slane %v1438, 4
    %v1440 = vadd.f32 %v1438, %v1439
    %v1441 = vrot.slane %v1440, 2
    %v1442 = vadd.f32 %v1440, %v1441
    %v1443 = vrot.slane %v1442, 1
    %v1444 = vadd.f32 %v1442, %v1443
    %v1445 = vmul.f32 %v1427, %v1427
    %v1446 = vmul.f32 %v1428, %v1428
    %v1447 = vsel %vm82, %v1445, 0.0
    %v1448 = vrot.slane %v1447, 4
    %v1449 = vadd.f32 %v1447, %v1448
    %v1450 = vrot.slane %v1449, 2
    %v1451 = vadd.f32 %v1449, %v1450
    %v1452 = vrot.slane %v1451, 1
    %v1453 = vadd.f32 %v1451, %v1452
    %v1454 = vsel %vm82, %v1446, 0.0
    %v1455 = vrot.slane %v1454, 4
    %v1456 = vadd.f32 %v1454, %v1455
    %v1457 = vrot.slane %v1456, 2
    %v1458 = vadd.f32 %v1456, %v1457
    %v1459 = vrot.slane %v1458, 1
    %v1460 = vadd.f32 %v1458, %v1459
    %v1461 = vmax.f32 %v1453, 1e-12
    %v1462 = vmax.f32 %v1460, 1e-12
    %v1463 = vrsqrt.pop %v1461
    %v1464 = vrsqrt.pop %v1462
    %v1465 = vmul.f32 %v1437, %v1463
    %v1466 = vmul.f32 %v1444, %v1464
    %v1467 = vmul.f32 %v1427, %v1465
    %v1468 = vmul.f32 %v1428, %v1466
    %v1469 = vpack.c.bf16 %v1467, %v1467
    %v1470 = vpack.c.bf16 %v1468, %v1468
    %v1472 = vsel %vm172, %v1469, 0
    %v1475 = vsel %vm172, %v1470, 0
    %1477 = vmatprep.subr.bf16.mxu0 %v1475
    %1478 = vmatpush1.bf16.msra.mxu0 %v1472
    %1479 = vmatprep.subr.bf16.mxu0 0
    %1480 = vmatpush1.bf16.msra.mxu0 0
    %1481 = vmatprep.subr.bf16.mxu0 0
    %1482 = vmatpush1.bf16.msra.mxu0 0
    %1483 = vmatprep.subr.bf16.mxu0 0
    %1484 = vmatpush1.bf16.msra.mxu0 0
    %1485 = vmatprep.subr.bf16.mxu0 0
    %1486 = vmatpush1.bf16.msra.mxu0 0
    %1487 = vmatprep.subr.bf16.mxu0 0
    %1488 = vmatpush1.bf16.msra.mxu0 0
    %1489 = vmatprep.subr.bf16.mxu0 0
    %1490 = vmatpush1.bf16.msra.mxu0 0
    %1491 = vmatprep.subr.bf16.mxu0 0
    %1492 = vmatpush1.bf16.msra.mxu0 0
    %1493 = vmatprep.subr.bf16.mxu0 0
    %1494 = vmatpush1.bf16.msra.mxu0 0
    %1495 = vmatprep.subr.bf16.mxu0 0
    %1496 = vmatpush1.bf16.msra.mxu0 0
    %1497 = vmatprep.subr.bf16.mxu0 0
    %1498 = vmatpush1.bf16.msra.mxu0 0
    %1499 = vmatprep.subr.bf16.mxu0 0
    %1500 = vmatpush1.bf16.msra.mxu0 0
    %1501 = vmatprep.subr.bf16.mxu0 0
    %1502 = vmatpush1.bf16.msra.mxu0 0
    %1503 = vmatprep.subr.bf16.mxu0 0
    %1504 = vmatpush1.bf16.msra.mxu0 0
    %1505 = vmatprep.subr.bf16.mxu0 0
    %1506 = vmatpush1.bf16.msra.mxu0 0
    %1507 = vmatprep.subr.bf16.mxu0 0
    %1508 = vmatpush1.bf16.msra.mxu0 0
    %1509 = vmatprep.mubr.bf16.mxu0 0
    %1510 = vmatmul.mubr.bf16.gmra.mrb[0].mxu0 %v857
    %v1511 = vpop.f32.mrb[0].mxu0
    %v1512 = vadd.f32 %v854, %v1511
    %v1513 = vpop.f32.mrb[0].mxu0
    %v1514 = vadd.f32 %v854, %v1513
    %v1515 = vpop.f32.mrb[0].mxu0
    %v1516 = vpop.f32.mrb[0].mxu0
    %1517 = vdwg.mxu0
    %v1518 = vmul.f32 %v1512, %v908
    %v1519 = vmul.f32 %v1514, %v908
    %v1522 = vcombine.low %v1518, %v1519
    %v1524 = vadd.f32 %v1313, %v1522
    %s1525 = scalar_lea.vmem [#allocation7], 8
    %1526 = vst [vmem:[%s1525] sm:$0xff] %v1524
    // Predicated region
    $region42: #{tpu_custom_call.1} parent=1 // pred_check
      _
    $region43: #{tpu_custom_call.1} parent=1 // pred_check_branch
      %1528 = sbr.rel (0) target = $region45
    $region44: #{tpu_custom_call.1} parent=1 // pred_region
      %s1530 = ssub.s32 256, 256
      %1531 = vsyncadd [#allocation4], %s1530
      %s1532 = sshll.u32 [#allocation7], 4
      %s1533 = int_to_ptr.vmem [resolvable:$true] %s1532
      %1538 = dma.vmem_to_hbm [thread:$0]  %s1533, 256, %s8, [#allocation4], 128, 128, 8
    $region45: #{tpu_custom_call.1} parent=1 // pred_fallthru
      _
    // Predicated region
    $region46: #{tpu_custom_call.1} parent=1 // pred_check
      _
    $region47: #{tpu_custom_call.1} parent=1 // pred_check_branch
      %1540 = sbr.rel (0) target = $region49
    $region48: #{tpu_custom_call.1} parent=1 // pred_region
      %1541 = dma.done [#allocation4], 256
    $region49: #{tpu_custom_call.1} parent=1 // pred_fallthru
      _
    %1542 = vsyncpa [#allocation3], 1
    %1543 = vsyncpa [#allocation6], 1
    %1544 = vsyncpa [#allocation4], 1

</llo_original>
